<compile_context>
chip_gen: v6e
topology: v6e:2x2x1
jax: 0.10.0
libtpu: 0.0.40
codegen_flags: <defaults>
</compile_context>

<pallas_src>
import functools

import jax
import jax.numpy as jnp
from jax import lax
from jax.experimental import pallas as pl
from jax.experimental.pallas import tpu as pltpu


def _vecint_kernel(vec_ref, base_ref, out_ref, *, H, W, HWp, nsteps, ktile):
    """Fused scaling-and-squaring integration of one (2, HWp) vector field."""
    f32 = jnp.float32
    bf16 = jnp.bfloat16
    n_ktiles = HWp // ktile

    scale = 1.0 / (2.0 ** nsteps)
    v0 = vec_ref[0].astype(f32) * scale                    # (2, HWp)
    base = base_ref[...]                                   # (2, HWp): row0=y, row1=x

    # ---- grid-invariant constants, hoisted out of the squaring loop ----
    lim = jnp.concatenate(
        [jnp.full((1, HWp), float(H - 1), f32),
         jnp.full((1, HWp), float(W - 1), f32)], axis=0)   # (2, HWp)
    k_iota = lax.broadcasted_iota(jnp.int32, (ktile, 1), 0)  # (ktile, 1) sublane iota

    def warp(field):
        """Bilinear warp of `field` (2, HWp) by itself; zeros outside the image."""
        # Coordinate / weight math on the full stacked (2, HWp) tile (VPU).
        coord = base + field
        c0 = jnp.floor(coord)
        c1 = c0 + 1.0
        w1 = coord - c0
        w0 = 1.0 - w1
        valid0 = ((c0 >= 0.0) & (c0 <= lim)).astype(f32)
        valid1 = ((c1 >= 0.0) & (c1 <= lim)).astype(f32)
        c0i = jnp.clip(c0, 0.0, lim).astype(jnp.int32)
        c1i = jnp.clip(c1, 0.0, lim).astype(jnp.int32)

        y0, x0 = c0i[0:1], c0i[1:2]
        y1, x1 = c1i[0:1], c1i[1:2]
        i00 = y0 * W + x0                                  # (1, HWp) int32
        i01 = y0 * W + x1
        i10 = y1 * W + x0
        i11 = y1 * W + x1

        # grid_sample(padding_mode='zeros'): OOB corners contribute zero weight.
        w00 = w0[0:1] * w0[1:2] * valid0[0:1] * valid0[1:2]
        w01 = w0[0:1] * w1[1:2] * valid0[0:1] * valid1[1:2]
        w10 = w1[0:1] * w0[1:2] * valid1[0:1] * valid0[1:2]
        w11 = w1[0:1] * w1[1:2] * valid1[0:1] * valid1[1:2]

        # Split the f32 field into 3 exact bf16 planes; one stacked (6, ktile)
        # LHS matmul per corner against exact 0/1 masks reconstructs the f32
        # gather bit-exactly.
        f_hi = field.astype(bf16)
        r1 = field - f_hi.astype(f32)
        f_mid = r1.astype(bf16)
        f_lo = (r1 - f_mid.astype(f32)).astype(bf16)
        planes = jnp.concatenate([f_hi, f_mid, f_lo], axis=0)   # (6, HWp) bf16

        def corner_gather(idx):
            # result[c, p] == field[c, idx[p]]; masks built per K-tile so VMEM
            # stays bounded by ktile * HWp, independent of image size.
            acc = jnp.zeros((6, HWp), f32)
            for t in range(n_ktiles):          # static K-tile loop (traced once)
                lo = t * ktile
                oh = ((k_iota + lo) == idx).astype(bf16)         # (ktile, HWp)
                slab = planes[:, lo:lo + ktile]                  # (6, ktile)
                acc = acc + jnp.dot(slab, oh, preferred_element_type=f32)
            return acc[0:2] + acc[2:4] + acc[4:6]                # (2, HWp)

        # Bilinear weights hit the small (2, HWp) results, never the masks.
        return (w00 * corner_gather(i00) + w01 * corner_gather(i01)
                + w10 * corner_gather(i10) + w11 * corner_gather(i11))

    # Scaling and squaring: vec <- vec + warp(vec, vec), nsteps times.
    v = lax.fori_loop(0, nsteps, lambda _, vv: vv + warp(vv), v0)
    out_ref[0] = v.astype(out_ref.dtype)


def vec_int(vec, nsteps, *, ktile=None):
    """VecInt forward: vec (N, 2, H, W) float32 -> integrated field (N, 2, H, W)."""
    N, C, H, W = vec.shape
    assert C == 2, "2-D vector field expected (C == 2)"
    HW = H * W
    HWp = ((HW + 127) // 128) * 128          # lane-dense, padded to 128

    if ktile is None:
        ktile = min(512, HWp)
        while HWp % ktile:
            ktile -= 128
    assert ktile % 128 == 0 and HWp % ktile == 0

    # Lane-dense layout: plain reshape (no transpose); channels stay on sublanes.
    vec_flat = vec.reshape(N, 2, HW)
    if HWp != HW:
        # Padded lanes never act as gather sources (all target indices are
        # clipped into [0, HW-1]) and are sliced off below.
        vec_flat = jnp.pad(vec_flat, ((0, 0), (0, 0), (0, HWp - HW)))

    # Identity sampling grid (SpatialTransformer's registered buffer), lane-dense.
    pix = jnp.arange(HWp, dtype=jnp.int32)
    base = jnp.stack([(pix // W).astype(jnp.float32),
                      (pix % W).astype(jnp.float32)], axis=0)        # (2, HWp)

    # VMEM budget: 4 transient (ktile, HWp) bf16 corner masks + small f32 state
    # + double-buffered I/O; clamp to [32 MiB, 64 MiB] so v7x (64 MiB physical)
    # sizing is respected.
    need = 4 * ktile * HWp * 2 + 64 * HWp * 4 + (4 << 20)
    vmem_limit = int(min(max(need, 32 << 20), 64 << 20))

    kernel = functools.partial(_vecint_kernel, H=H, W=W, HWp=HWp,
                               nsteps=nsteps, ktile=ktile)
    out_flat = pl.pallas_call(
        kernel,
        out_shape=jax.ShapeDtypeStruct((N, 2, HWp), vec.dtype),
        grid_spec=pltpu.PrefetchScalarGridSpec(
            num_scalar_prefetch=0,
            grid=(N,),
            in_specs=[pl.BlockSpec((1, 2, HWp), lambda n: (n, 0, 0)),
                      pl.BlockSpec((2, HWp), lambda n: (0, 0))],
            out_specs=pl.BlockSpec((1, 2, HWp), lambda n: (n, 0, 0)),
        ),
        compiler_params=pltpu.CompilerParams(
            dimension_semantics=("parallel",),
            vmem_limit_bytes=vmem_limit),
    )(vec_flat, base)

    return out_flat[:, :, :HW].reshape(N, 2, H, W)


# ----------------------- plain-JAX reference -----------------------

def _warp_reference(src, flow):
    """Bilinear warp matching torch grid_sample(align_corners=True, zeros pad)."""
    N, C, H, W = src.shape
    yy = jnp.arange(H, dtype=jnp.float32)[:, None]
    xx = jnp.arange(W, dtype=jnp.float32)[None, :]
    y = yy[None] + flow[:, 0]
    x = xx[None] + flow[:, 1]
    y0 = jnp.floor(y); x0 = jnp.floor(x)
    y1 = y0 + 1.0; x1 = x0 + 1.0
    wy1 = y - y0; wy0 = 1.0 - wy1
    wx1 = x - x0; wx0 = 1.0 - wx1

    def v(c, hi):
        return ((c >= 0) & (c <= hi - 1)).astype(jnp.float32)

    vy0, vy1, vx0, vx1 = v(y0, H), v(y1, H), v(x0, W), v(x1, W)

    def ci(c, hi):
        return jnp.clip(c, 0, hi - 1).astype(jnp.int32)

    y0i, y1i, x0i, x1i = ci(y0, H), ci(y1, H), ci(x0, W), ci(x1, W)
    src_f = src.reshape(N, C, H * W)

    def g(yi, xi):
        idx = (yi * W + xi).reshape(N, 1, H * W)
        idx = jnp.broadcast_to(idx, (N, C, H * W))
        return jnp.take_along_axis(src_f, idx, axis=2).reshape(N, C, H, W)

    return (g(y0i, x0i) * (wy0 * wx0 * vy0 * vx0)[:, None]
            + g(y0i, x1i) * (wy0 * wx1 * vy0 * vx1)[:, None]
            + g(y1i, x0i) * (wy1 * wx0 * vy1 * vx0)[:, None]
            + g(y1i, x1i) * (wy1 * wx1 * vy1 * vx1)[:, None])


def _vecint_reference(vec, nsteps):
    v = vec * (1.0 / 2.0 ** nsteps)
    for _ in range(nsteps):
        v = v + _warp_reference(v, v)
    return v


if __name__ == "__main__":
    key = jax.random.PRNGKey(0)
    N, C, H, W = 2, 2, 16, 16
    nsteps = 7

    # Stationary velocity field; amplitude chosen so the integrated flow
    # reaches a few pixels (exercising the zero-padding path near the edges).
    vec = 3.0 * jax.random.normal(key, (N, C, H, W), dtype=jnp.float32)

    # ktile=128 forces the multi-K-tile gather path even at this small size.
    out = jax.block_until_ready(vec_int(vec, nsteps, ktile=128))
    ref = jax.block_until_ready(_vecint_reference(vec, nsteps))

    assert out.shape == (N, C, H, W)
    assert jnp.allclose(out, ref, atol=1e-4, rtol=1e-4), "mismatch vs reference"

    print("KERNEL_OK")
</pallas_src>

<mosaic_0001>
module attributes {stable_mosaic.version = 11 : i64} {
  func.func @_vecint_kernel(%arg0: i32, %arg1: memref<1x2x256xf32, #tpu.memory_space<vmem>>, %arg2: memref<2x256xf32, #tpu.memory_space<vmem>>, %arg3: memref<1x2x256xf32, #tpu.memory_space<vmem>>) attributes {dimension_semantics = [#tpu.dimension_semantics<parallel>], iteration_bounds = array<i64: 2>, scalar_prefetch = 0 : i64, scratch_operands = 0 : i64, tpu.core_type = #tpu.core_type<tc>, window_params = [{transform_indices = @transform_0, window_bounds = array<i64: 1, 2, 256>}, {pipeline_mode = #tpu.pipeline_mode<synchronous>, transform_indices = @transform_1, window_bounds = array<i64: 2, 256>}, {transform_indices = @transform_2, window_bounds = array<i64: 1, 2, 256>}]} {
    %c0 = arith.constant 0 : index
    %c0_0 = arith.constant 0 : index
    %c0_1 = arith.constant 0 : index
    %0 = vector.load %arg1[%c0, %c0_0, %c0_1] : memref<1x2x256xf32, #tpu.memory_space<vmem>>, vector<1x2x256xf32>
    %1 = vector.shape_cast %0 : vector<1x2x256xf32> to vector<2x256xf32>
    %cst = arith.constant 7.812500e-03 : f32
    %2 = vector.broadcast %cst : f32 to vector<2x256xf32>
    %3 = arith.mulf %1, %2 : vector<2x256xf32>
    %c0_2 = arith.constant 0 : index
    %c0_3 = arith.constant 0 : index
    %4 = vector.load %arg2[%c0_2, %c0_3] : memref<2x256xf32, #tpu.memory_space<vmem>>, vector<2x256xf32>
    %cst_4 = arith.constant 1.500000e+01 : f32
    %5 = vector.broadcast %cst_4 : f32 to vector<1x256xf32>
    %cst_5 = arith.constant 1.500000e+01 : f32
    %6 = vector.broadcast %cst_5 : f32 to vector<1x256xf32>
    %7 = tpu.concatenate %5, %6 in 0 : vector<1x256xf32>, vector<1x256xf32> -> vector<2x256xf32>
    %8 = tpu.iota {dimensions = array<i32: 0>} : vector<128x1xi32>
    %c0_i32 = arith.constant 0 : i32
    %c7_i32 = arith.constant 7 : i32
    %9 = arith.addi %c0_i32, %c7_i32 : i32
    %c1_i32 = arith.constant 1 : i32
    %10 = scf.for %arg4 = %c0_i32 to %9 step %c1_i32 iter_args(%arg5 = %3) -> (vector<2x256xf32>)  : i32 {
      %14 = arith.addf %4, %arg5 : vector<2x256xf32>
      %15 = math.floor %14 : vector<2x256xf32>
      %cst_9 = arith.constant 1.000000e+00 : f32
      %16 = vector.broadcast %cst_9 : f32 to vector<2x256xf32>
      %17 = arith.addf %15, %16 : vector<2x256xf32>
      %18 = arith.subf %14, %15 : vector<2x256xf32>
      %cst_10 = arith.constant 1.000000e+00 : f32
      %19 = vector.broadcast %cst_10 : f32 to vector<2x256xf32>
      %20 = arith.subf %19, %18 : vector<2x256xf32>
      %cst_11 = arith.constant 0.000000e+00 : f32
      %21 = vector.broadcast %cst_11 : f32 to vector<2x256xf32>
      %22 = arith.cmpf oge, %15, %21 : vector<2x256xf32>
      %23 = arith.cmpf ole, %15, %7 : vector<2x256xf32>
      %24 = arith.andi %22, %23 : vector<2x256xi1>
      %25 = arith.extui %24 : vector<2x256xi1> to vector<2x256xi32>
      %26 = arith.sitofp %25 : vector<2x256xi32> to vector<2x256xf32>
      %cst_12 = arith.constant 0.000000e+00 : f32
      %27 = vector.broadcast %cst_12 : f32 to vector<2x256xf32>
      %28 = arith.cmpf oge, %17, %27 : vector<2x256xf32>
      %29 = arith.cmpf ole, %17, %7 : vector<2x256xf32>
      %30 = arith.andi %28, %29 : vector<2x256xi1>
      %31 = arith.extui %30 : vector<2x256xi1> to vector<2x256xi32>
      %32 = arith.sitofp %31 : vector<2x256xi32> to vector<2x256xf32>
      %cst_13 = arith.constant 0.000000e+00 : f32
      %33 = vector.broadcast %cst_13 : f32 to vector<2x256xf32>
      %34 = arith.maximumf %33, %15 : vector<2x256xf32>
      %35 = arith.minimumf %7, %34 : vector<2x256xf32>
      %36 = arith.fptosi %35 : vector<2x256xf32> to vector<2x256xi32>
      %cst_14 = arith.constant 0.000000e+00 : f32
      %37 = vector.broadcast %cst_14 : f32 to vector<2x256xf32>
      %38 = arith.maximumf %37, %17 : vector<2x256xf32>
      %39 = arith.minimumf %7, %38 : vector<2x256xf32>
      %40 = arith.fptosi %39 : vector<2x256xf32> to vector<2x256xi32>
      %41 = vector.extract_strided_slice %36 {offsets = [0, 0], sizes = [1, 256], strides = [1, 1]} : vector<2x256xi32> to vector<1x256xi32>
      %42 = vector.extract_strided_slice %36 {offsets = [1, 0], sizes = [1, 256], strides = [1, 1]} : vector<2x256xi32> to vector<1x256xi32>
      %43 = vector.extract_strided_slice %40 {offsets = [0, 0], sizes = [1, 256], strides = [1, 1]} : vector<2x256xi32> to vector<1x256xi32>
      %44 = vector.extract_strided_slice %40 {offsets = [1, 0], sizes = [1, 256], strides = [1, 1]} : vector<2x256xi32> to vector<1x256xi32>
      %c16_i32 = arith.constant 16 : i32
      %45 = vector.broadcast %c16_i32 : i32 to vector<1x256xi32>
      %46 = arith.muli %41, %45 : vector<1x256xi32>
      %47 = arith.addi %46, %42 : vector<1x256xi32>
      %c16_i32_15 = arith.constant 16 : i32
      %48 = vector.broadcast %c16_i32_15 : i32 to vector<1x256xi32>
      %49 = arith.muli %41, %48 : vector<1x256xi32>
      %50 = arith.addi %49, %44 : vector<1x256xi32>
      %c16_i32_16 = arith.constant 16 : i32
      %51 = vector.broadcast %c16_i32_16 : i32 to vector<1x256xi32>
      %52 = arith.muli %43, %51 : vector<1x256xi32>
      %53 = arith.addi %52, %42 : vector<1x256xi32>
      %c16_i32_17 = arith.constant 16 : i32
      %54 = vector.broadcast %c16_i32_17 : i32 to vector<1x256xi32>
      %55 = arith.muli %43, %54 : vector<1x256xi32>
      %56 = arith.addi %55, %44 : vector<1x256xi32>
      %57 = vector.extract_strided_slice %20 {offsets = [0, 0], sizes = [1, 256], strides = [1, 1]} : vector<2x256xf32> to vector<1x256xf32>
      %58 = vector.extract_strided_slice %20 {offsets = [1, 0], sizes = [1, 256], strides = [1, 1]} : vector<2x256xf32> to vector<1x256xf32>
      %59 = arith.mulf %57, %58 : vector<1x256xf32>
      %60 = vector.extract_strided_slice %26 {offsets = [0, 0], sizes = [1, 256], strides = [1, 1]} : vector<2x256xf32> to vector<1x256xf32>
      %61 = arith.mulf %59, %60 : vector<1x256xf32>
      %62 = vector.extract_strided_slice %26 {offsets = [1, 0], sizes = [1, 256], strides = [1, 1]} : vector<2x256xf32> to vector<1x256xf32>
      %63 = arith.mulf %61, %62 : vector<1x256xf32>
      %64 = vector.extract_strided_slice %20 {offsets = [0, 0], sizes = [1, 256], strides = [1, 1]} : vector<2x256xf32> to vector<1x256xf32>
      %65 = vector.extract_strided_slice %18 {offsets = [1, 0], sizes = [1, 256], strides = [1, 1]} : vector<2x256xf32> to vector<1x256xf32>
      %66 = arith.mulf %64, %65 : vector<1x256xf32>
      %67 = vector.extract_strided_slice %26 {offsets = [0, 0], sizes = [1, 256], strides = [1, 1]} : vector<2x256xf32> to vector<1x256xf32>
      %68 = arith.mulf %66, %67 : vector<1x256xf32>
      %69 = vector.extract_strided_slice %32 {offsets = [1, 0], sizes = [1, 256], strides = [1, 1]} : vector<2x256xf32> to vector<1x256xf32>
      %70 = arith.mulf %68, %69 : vector<1x256xf32>
      %71 = vector.extract_strided_slice %18 {offsets = [0, 0], sizes = [1, 256], strides = [1, 1]} : vector<2x256xf32> to vector<1x256xf32>
      %72 = vector.extract_strided_slice %20 {offsets = [1, 0], sizes = [1, 256], strides = [1, 1]} : vector<2x256xf32> to vector<1x256xf32>
      %73 = arith.mulf %71, %72 : vector<1x256xf32>
      %74 = vector.extract_strided_slice %32 {offsets = [0, 0], sizes = [1, 256], strides = [1, 1]} : vector<2x256xf32> to vector<1x256xf32>
      %75 = arith.mulf %73, %74 : vector<1x256xf32>
      %76 = vector.extract_strided_slice %26 {offsets = [1, 0], sizes = [1, 256], strides = [1, 1]} : vector<2x256xf32> to vector<1x256xf32>
      %77 = arith.mulf %75, %76 : vector<1x256xf32>
      %78 = vector.extract_strided_slice %18 {offsets = [0, 0], sizes = [1, 256], strides = [1, 1]} : vector<2x256xf32> to vector<1x256xf32>
      %79 = vector.extract_strided_slice %18 {offsets = [1, 0], sizes = [1, 256], strides = [1, 1]} : vector<2x256xf32> to vector<1x256xf32>
      %80 = arith.mulf %78, %79 : vector<1x256xf32>
      %81 = vector.extract_strided_slice %32 {offsets = [0, 0], sizes = [1, 256], strides = [1, 1]} : vector<2x256xf32> to vector<1x256xf32>
      %82 = arith.mulf %80, %81 : vector<1x256xf32>
      %83 = vector.extract_strided_slice %32 {offsets = [1, 0], sizes = [1, 256], strides = [1, 1]} : vector<2x256xf32> to vector<1x256xf32>
      %84 = arith.mulf %82, %83 : vector<1x256xf32>
      %85 = arith.truncf %arg5 : vector<2x256xf32> to vector<2x256xbf16>
      %86 = arith.extf %85 : vector<2x256xbf16> to vector<2x256xf32>
      %87 = arith.subf %arg5, %86 : vector<2x256xf32>
      %88 = arith.truncf %87 : vector<2x256xf32> to vector<2x256xbf16>
      %89 = arith.extf %88 : vector<2x256xbf16> to vector<2x256xf32>
      %90 = arith.subf %87, %89 : vector<2x256xf32>
      %91 = arith.truncf %90 : vector<2x256xf32> to vector<2x256xbf16>
      %92 = tpu.concatenate %85, %88, %91 in 0 : vector<2x256xbf16>, vector<2x256xbf16>, vector<2x256xbf16> -> vector<6x256xbf16>
      %cst_18 = arith.constant 0.000000e+00 : f32
      %93 = vector.broadcast %cst_18 : f32 to vector<6x256xf32>
      %c0_i32_19 = arith.constant 0 : i32
      %94 = vector.broadcast %c0_i32_19 : i32 to vector<128x1xi32>
      %95 = arith.addi %8, %94 : vector<128x1xi32>
      %96 = vector.broadcast %95 : vector<128x1xi32> to vector<128x256xi32>
      %97 = vector.broadcast %47 : vector<1x256xi32> to vector<128x256xi32>
      %98 = arith.cmpi eq, %96, %97 : vector<128x256xi32>
      %99 = arith.extui %98 : vector<128x256xi1> to vector<128x256xi32>
      %100 = arith.sitofp %99 : vector<128x256xi32> to vector<128x256xf32>
      %101 = arith.truncf %100 : vector<128x256xf32> to vector<128x256xbf16>
      %102 = vector.extract_strided_slice %92 {offsets = [0, 0], sizes = [6, 128], strides = [1, 1]} : vector<6x256xbf16> to vector<6x128xbf16>
      %cst_20 = arith.constant dense<0.000000e+00> : vector<6x256xf32>
      %103 = tpu.matmul %102, %101, %cst_20 {dimension_numbers = #tpu.dot_dimension_numbers<[1], [0], [0], [1], [0, 0, 1, 1], [], []>} : vector<6x128xbf16>, vector<128x256xbf16>, vector<6x256xf32> -> vector<6x256xf32>
      %104 = arith.addf %93, %103 : vector<6x256xf32>
      %c128_i32 = arith.constant 128 : i32
      %105 = vector.broadcast %c128_i32 : i32 to vector<128x1xi32>
      %106 = arith.addi %8, %105 : vector<128x1xi32>
      %107 = vector.broadcast %106 : vector<128x1xi32> to vector<128x256xi32>
      %108 = vector.broadcast %47 : vector<1x256xi32> to vector<128x256xi32>
      %109 = arith.cmpi eq, %107, %108 : vector<128x256xi32>
      %110 = arith.extui %109 : vector<128x256xi1> to vector<128x256xi32>
      %111 = arith.sitofp %110 : vector<128x256xi32> to vector<128x256xf32>
      %112 = arith.truncf %111 : vector<128x256xf32> to vector<128x256xbf16>
      %113 = vector.extract_strided_slice %92 {offsets = [0, 128], sizes = [6, 128], strides = [1, 1]} : vector<6x256xbf16> to vector<6x128xbf16>
      %cst_21 = arith.constant dense<0.000000e+00> : vector<6x256xf32>
      %114 = tpu.matmul %113, %112, %cst_21 {dimension_numbers = #tpu.dot_dimension_numbers<[1], [0], [0], [1], [0, 0, 1, 1], [], []>} : vector<6x128xbf16>, vector<128x256xbf16>, vector<6x256xf32> -> vector<6x256xf32>
      %115 = arith.addf %104, %114 : vector<6x256xf32>
      %116 = vector.extract_strided_slice %115 {offsets = [0, 0], sizes = [2, 256], strides = [1, 1]} : vector<6x256xf32> to vector<2x256xf32>
      %117 = vector.extract_strided_slice %115 {offsets = [2, 0], sizes = [2, 256], strides = [1, 1]} : vector<6x256xf32> to vector<2x256xf32>
      %118 = arith.addf %116, %117 : vector<2x256xf32>
      %119 = vector.extract_strided_slice %115 {offsets = [4, 0], sizes = [2, 256], strides = [1, 1]} : vector<6x256xf32> to vector<2x256xf32>
      %120 = arith.addf %118, %119 : vector<2x256xf32>
      %121 = vector.broadcast %63 : vector<1x256xf32> to vector<2x256xf32>
      %122 = arith.mulf %121, %120 : vector<2x256xf32>
      %cst_22 = arith.constant 0.000000e+00 : f32
      %123 = vector.broadcast %cst_22 : f32 to vector<6x256xf32>
      %c0_i32_23 = arith.constant 0 : i32
      %124 = vector.broadcast %c0_i32_23 : i32 to vector<128x1xi32>
      %125 = arith.addi %8, %124 : vector<128x1xi32>
      %126 = vector.broadcast %125 : vector<128x1xi32> to vector<128x256xi32>
      %127 = vector.broadcast %50 : vector<1x256xi32> to vector<128x256xi32>
      %128 = arith.cmpi eq, %126, %127 : vector<128x256xi32>
      %129 = arith.extui %128 : vector<128x256xi1> to vector<128x256xi32>
      %130 = arith.sitofp %129 : vector<128x256xi32> to vector<128x256xf32>
      %131 = arith.truncf %130 : vector<128x256xf32> to vector<128x256xbf16>
      %132 = vector.extract_strided_slice %92 {offsets = [0, 0], sizes = [6, 128], strides = [1, 1]} : vector<6x256xbf16> to vector<6x128xbf16>
      %cst_24 = arith.constant dense<0.000000e+00> : vector<6x256xf32>
      %133 = tpu.matmul %132, %131, %cst_24 {dimension_numbers = #tpu.dot_dimension_numbers<[1], [0], [0], [1], [0, 0, 1, 1], [], []>} : vector<6x128xbf16>, vector<128x256xbf16>, vector<6x256xf32> -> vector<6x256xf32>
      %134 = arith.addf %123, %133 : vector<6x256xf32>
      %c128_i32_25 = arith.constant 128 : i32
      %135 = vector.broadcast %c128_i32_25 : i32 to vector<128x1xi32>
      %136 = arith.addi %8, %135 : vector<128x1xi32>
      %137 = vector.broadcast %136 : vector<128x1xi32> to vector<128x256xi32>
      %138 = vector.broadcast %50 : vector<1x256xi32> to vector<128x256xi32>
      %139 = arith.cmpi eq, %137, %138 : vector<128x256xi32>
      %140 = arith.extui %139 : vector<128x256xi1> to vector<128x256xi32>
      %141 = arith.sitofp %140 : vector<128x256xi32> to vector<128x256xf32>
      %142 = arith.truncf %141 : vector<128x256xf32> to vector<128x256xbf16>
      %143 = vector.extract_strided_slice %92 {offsets = [0, 128], sizes = [6, 128], strides = [1, 1]} : vector<6x256xbf16> to vector<6x128xbf16>
      %cst_26 = arith.constant dense<0.000000e+00> : vector<6x256xf32>
      %144 = tpu.matmul %143, %142, %cst_26 {dimension_numbers = #tpu.dot_dimension_numbers<[1], [0], [0], [1], [0, 0, 1, 1], [], []>} : vector<6x128xbf16>, vector<128x256xbf16>, vector<6x256xf32> -> vector<6x256xf32>
      %145 = arith.addf %134, %144 : vector<6x256xf32>
      %146 = vector.extract_strided_slice %145 {offsets = [0, 0], sizes = [2, 256], strides = [1, 1]} : vector<6x256xf32> to vector<2x256xf32>
      %147 = vector.extract_strided_slice %145 {offsets = [2, 0], sizes = [2, 256], strides = [1, 1]} : vector<6x256xf32> to vector<2x256xf32>
      %148 = arith.addf %146, %147 : vector<2x256xf32>
      %149 = vector.extract_strided_slice %145 {offsets = [4, 0], sizes = [2, 256], strides = [1, 1]} : vector<6x256xf32> to vector<2x256xf32>
      %150 = arith.addf %148, %149 : vector<2x256xf32>
      %151 = vector.broadcast %70 : vector<1x256xf32> to vector<2x256xf32>
      %152 = arith.mulf %151, %150 : vector<2x256xf32>
      %153 = arith.addf %122, %152 : vector<2x256xf32>
      %cst_27 = arith.constant 0.000000e+00 : f32
      %154 = vector.broadcast %cst_27 : f32 to vector<6x256xf32>
      %c0_i32_28 = arith.constant 0 : i32
      %155 = vector.broadcast %c0_i32_28 : i32 to vector<128x1xi32>
      %156 = arith.addi %8, %155 : vector<128x1xi32>
      %157 = vector.broadcast %156 : vector<128x1xi32> to vector<128x256xi32>
      %158 = vector.broadcast %53 : vector<1x256xi32> to vector<128x256xi32>
      %159 = arith.cmpi eq, %157, %158 : vector<128x256xi32>
      %160 = arith.extui %159 : vector<128x256xi1> to vector<128x256xi32>
      %161 = arith.sitofp %160 : vector<128x256xi32> to vector<128x256xf32>
      %162 = arith.truncf %161 : vector<128x256xf32> to vector<128x256xbf16>
      %163 = vector.extract_strided_slice %92 {offsets = [0, 0], sizes = [6, 128], strides = [1, 1]} : vector<6x256xbf16> to vector<6x128xbf16>
      %cst_29 = arith.constant dense<0.000000e+00> : vector<6x256xf32>
      %164 = tpu.matmul %163, %162, %cst_29 {dimension_numbers = #tpu.dot_dimension_numbers<[1], [0], [0], [1], [0, 0, 1, 1], [], []>} : vector<6x128xbf16>, vector<128x256xbf16>, vector<6x256xf32> -> vector<6x256xf32>
      %165 = arith.addf %154, %164 : vector<6x256xf32>
      %c128_i32_30 = arith.constant 128 : i32
      %166 = vector.broadcast %c128_i32_30 : i32 to vector<128x1xi32>
      %167 = arith.addi %8, %166 : vector<128x1xi32>
      %168 = vector.broadcast %167 : vector<128x1xi32> to vector<128x256xi32>
      %169 = vector.broadcast %53 : vector<1x256xi32> to vector<128x256xi32>
      %170 = arith.cmpi eq, %168, %169 : vector<128x256xi32>
      %171 = arith.extui %170 : vector<128x256xi1> to vector<128x256xi32>
      %172 = arith.sitofp %171 : vector<128x256xi32> to vector<128x256xf32>
      %173 = arith.truncf %172 : vector<128x256xf32> to vector<128x256xbf16>
      %174 = vector.extract_strided_slice %92 {offsets = [0, 128], sizes = [6, 128], strides = [1, 1]} : vector<6x256xbf16> to vector<6x128xbf16>
      %cst_31 = arith.constant dense<0.000000e+00> : vector<6x256xf32>
      %175 = tpu.matmul %174, %173, %cst_31 {dimension_numbers = #tpu.dot_dimension_numbers<[1], [0], [0], [1], [0, 0, 1, 1], [], []>} : vector<6x128xbf16>, vector<128x256xbf16>, vector<6x256xf32> -> vector<6x256xf32>
      %176 = arith.addf %165, %175 : vector<6x256xf32>
      %177 = vector.extract_strided_slice %176 {offsets = [0, 0], sizes = [2, 256], strides = [1, 1]} : vector<6x256xf32> to vector<2x256xf32>
      %178 = vector.extract_strided_slice %176 {offsets = [2, 0], sizes = [2, 256], strides = [1, 1]} : vector<6x256xf32> to vector<2x256xf32>
      %179 = arith.addf %177, %178 : vector<2x256xf32>
      %180 = vector.extract_strided_slice %176 {offsets = [4, 0], sizes = [2, 256], strides = [1, 1]} : vector<6x256xf32> to vector<2x256xf32>
      %181 = arith.addf %179, %180 : vector<2x256xf32>
      %182 = vector.broadcast %77 : vector<1x256xf32> to vector<2x256xf32>
      %183 = arith.mulf %182, %181 : vector<2x256xf32>
      %184 = arith.addf %153, %183 : vector<2x256xf32>
      %cst_32 = arith.constant 0.000000e+00 : f32
      %185 = vector.broadcast %cst_32 : f32 to vector<6x256xf32>
      %c0_i32_33 = arith.constant 0 : i32
      %186 = vector.broadcast %c0_i32_33 : i32 to vector<128x1xi32>
      %187 = arith.addi %8, %186 : vector<128x1xi32>
      %188 = vector.broadcast %187 : vector<128x1xi32> to vector<128x256xi32>
      %189 = vector.broadcast %56 : vector<1x256xi32> to vector<128x256xi32>
      %190 = arith.cmpi eq, %188, %189 : vector<128x256xi32>
      %191 = arith.extui %190 : vector<128x256xi1> to vector<128x256xi32>
      %192 = arith.sitofp %191 : vector<128x256xi32> to vector<128x256xf32>
      %193 = arith.truncf %192 : vector<128x256xf32> to vector<128x256xbf16>
      %194 = vector.extract_strided_slice %92 {offsets = [0, 0], sizes = [6, 128], strides = [1, 1]} : vector<6x256xbf16> to vector<6x128xbf16>
      %cst_34 = arith.constant dense<0.000000e+00> : vector<6x256xf32>
      %195 = tpu.matmul %194, %193, %cst_34 {dimension_numbers = #tpu.dot_dimension_numbers<[1], [0], [0], [1], [0, 0, 1, 1], [], []>} : vector<6x128xbf16>, vector<128x256xbf16>, vector<6x256xf32> -> vector<6x256xf32>
      %196 = arith.addf %185, %195 : vector<6x256xf32>
      %c128_i32_35 = arith.constant 128 : i32
      %197 = vector.broadcast %c128_i32_35 : i32 to vector<128x1xi32>
      %198 = arith.addi %8, %197 : vector<128x1xi32>
      %199 = vector.broadcast %198 : vector<128x1xi32> to vector<128x256xi32>
      %200 = vector.broadcast %56 : vector<1x256xi32> to vector<128x256xi32>
      %201 = arith.cmpi eq, %199, %200 : vector<128x256xi32>
      %202 = arith.extui %201 : vector<128x256xi1> to vector<128x256xi32>
      %203 = arith.sitofp %202 : vector<128x256xi32> to vector<128x256xf32>
      %204 = arith.truncf %203 : vector<128x256xf32> to vector<128x256xbf16>
      %205 = vector.extract_strided_slice %92 {offsets = [0, 128], sizes = [6, 128], strides = [1, 1]} : vector<6x256xbf16> to vector<6x128xbf16>
      %cst_36 = arith.constant dense<0.000000e+00> : vector<6x256xf32>
      %206 = tpu.matmul %205, %204, %cst_36 {dimension_numbers = #tpu.dot_dimension_numbers<[1], [0], [0], [1], [0, 0, 1, 1], [], []>} : vector<6x128xbf16>, vector<128x256xbf16>, vector<6x256xf32> -> vector<6x256xf32>
      %207 = arith.addf %196, %206 : vector<6x256xf32>
      %208 = vector.extract_strided_slice %207 {offsets = [0, 0], sizes = [2, 256], strides = [1, 1]} : vector<6x256xf32> to vector<2x256xf32>
      %209 = vector.extract_strided_slice %207 {offsets = [2, 0], sizes = [2, 256], strides = [1, 1]} : vector<6x256xf32> to vector<2x256xf32>
      %210 = arith.addf %208, %209 : vector<2x256xf32>
      %211 = vector.extract_strided_slice %207 {offsets = [4, 0], sizes = [2, 256], strides = [1, 1]} : vector<6x256xf32> to vector<2x256xf32>
      %212 = arith.addf %210, %211 : vector<2x256xf32>
      %213 = vector.broadcast %84 : vector<1x256xf32> to vector<2x256xf32>
      %214 = arith.mulf %213, %212 : vector<2x256xf32>
      %215 = arith.addf %184, %214 : vector<2x256xf32>
      %216 = arith.addf %arg5, %215 : vector<2x256xf32>
      scf.yield %216 : vector<2x256xf32>
    }
    %c0_6 = arith.constant 0 : index
    %c0_7 = arith.constant 0 : index
    %c0_8 = arith.constant 0 : index
    %11 = vector.load %arg3[%c0_6, %c0_7, %c0_8] : memref<1x2x256xf32, #tpu.memory_space<vmem>>, vector<1x2x256xf32>
    %12 = vector.shape_cast %11 : vector<1x2x256xf32> to vector<2x256xf32>
    %13 = vector.shape_cast %10 : vector<2x256xf32> to vector<1x2x256xf32>
    tpu.vector_store %arg3[%c0_6, %c0_7, %c0_8], %13 {strides = array<i32>} : memref<1x2x256xf32, #tpu.memory_space<vmem>>, vector<1x2x256xf32>,
    return
  }
  func.func @transform_0(%arg0: i32) -> (i32, i32, i32) {
    %c0_i32 = arith.constant 0 : i32
    %c0_i32_0 = arith.constant 0 : i32
    %c0_i32_1 = arith.constant 0 : i32
    return %arg0, %c0_i32, %c0_i32_0 : i32, i32, i32
  }
  func.func @transform_1(%arg0: i32) -> (i32, i32) {
    %c0_i32 = arith.constant 0 : i32
    %c0_i32_0 = arith.constant 0 : i32
    %c0_i32_1 = arith.constant 0 : i32
    return %c0_i32, %c0_i32_0 : i32, i32
  }
  func.func @transform_2(%arg0: i32) -> (i32, i32, i32) {
    %c0_i32 = arith.constant 0 : i32
    %c0_i32_0 = arith.constant 0 : i32
    %c0_i32_1 = arith.constant 0 : i32
    return %arg0, %c0_i32, %c0_i32_0 : i32, i32, i32
  }
}

</mosaic_0001>

<llo_original>
// kernel: tpu_custom_call.1
$region0: #{tpu_custom_call.1}
  #allocation0 [shape = 'u32[]', space=smem, size = 0x4, offset = 0x4, fixed_abs, tag = 'smem constant byte address 0x4 - core index']
  #allocation1 [shape = 'u32[144,128]{1,0:T(1,128)}', space=vmem, size = 0x12000, scoped, tag = 'internal scratch']
  %s0 = inlined_call_operand.hbm [shape: f32[2,2,256], index: 0, kind: input, shape index: {}]
  %s1 = inlined_call_operand.hbm [shape: f32[2,256], index: 1, kind: input, shape index: {}]
  %s2 = inlined_call_operand.hbm [shape: f32[2,2,256], index: 2, kind: output, shape index: {}]
  %s3 = sld [smem:[#allocation0]]
  $region56: #{tpu_custom_call.1} parent=0
    _
  %s5 = ssub.s32 1, %s3
  %s6 = scalar_select 0, %s5, %s3
  $region1: #{tpu_custom_call.1} parent=0
    #allocation2 [shape = 'u8[4096]{0}', space=vmem, size = 0x1000, scoped, tag = 'input window, operand 0']
    #allocation3 [shape = 's32[2]{0}', space=sflag, size = 0x8, scoped, tag = 'scoped memory for tpu_custom_call.1']
    #allocation4 [shape = 's32[2]{0}', space=sflag, size = 0x8, scoped, tag = 'scoped memory for tpu_custom_call.1']
    #allocation5 [shape = 'u8[2048]{0}', space=vmem, size = 0x800, scoped, tag = 'input window, operand 1, single buffered']
    #allocation6 [shape = 's32[1]{0}', space=sflag, size = 0x4, scoped, tag = 'scoped memory for tpu_custom_call.1']
    #allocation7 [shape = 'u8[4096]{0}', space=vmem, size = 0x1000, scoped, tag = 'output window, operand 0']
    %7 = vsyncpa [#allocation3], 0
    %s8 = scalar_lea.sflag [#allocation3], 1
    %9 = vsyncpa %s8, 0
    %10 = vsyncpa [#allocation6], 0
    %11 = vsyncpa [#allocation4], 0
    %s12 = scalar_lea.sflag [#allocation4], 1
    %13 = vsyncpa %s12, 0
    loop: start=0, step=1, limit=4
    $region2: #{tpu_custom_call.1} parent=1 // loop_pre_header
      _
    $region3: #{tpu_custom_call.1} parent=1 // loop_header
      %s15 = sphi 0, %s19
      %p16 = scmp.ge.s32.totalorder %s15, 4
      %s25 = sphi 0, %s27
      %s28 = sphi 0, %s25
      %s29 = sphi 0, %s28
      %s45 = sphi 0, %s29
      %s49 = sphi 0, %s49
      %s51 = sphi 0, %s49
      %s52 = sphi 0, %s51
      %s66 = sphi 0, %s52
      %s72 = sphi 0, %s74
      %s75 = sphi 0, %s72
      %s76 = sphi 0, %s75
      %s92 = sphi 0, %s76
    $region4: #{tpu_custom_call.1} parent=1 // loop_header_branch
      %18 = sbr.rel (%p16) target = $region8
    $region5: #{tpu_custom_call.1} parent=1 // loop_body
      %s20 = ssub.s32 %s15, 1
      %s21 = ssub.s32 %s15, 2
      %s22 = sadd.s32 %s15, 1
      %s23 = ssub.s32 %s15, %s22
      %p24 = scmp.eq.s32.totalorder %s23, 0
      %s26 = sadd.s32 %s25, 1
      %s27 = scalar_select %p24, %s25, %s26
      %p30 = pneg %p24
      %p31 = scmp.eq.s32.totalorder %s15, 1
      %p32 = por %p30, %p31
      %p33 = scmp.ne.s32.totalorder %s25, %s28
      %p34 = scmp.eq.s32.totalorder %s15, 0
      %p35 = por %p33, %p34
      %p36 = scmp.ne.s32.totalorder %s25, %s28
      %p37 = scmp.eq.s32.totalorder %s20, 1
      %p38 = por %p36, %p37
      %p39 = scmp.ne.s32.totalorder %s28, %s29
      %p40 = scmp.eq.s32.totalorder %s20, 0
      %p41 = por %p39, %p40
      %p42 = scmp.ne.s32.totalorder %s28, %s29
      %p43 = scmp.eq.s32.totalorder %s21, 1
      %p44 = por %p42, %p43
      %p46 = scmp.ne.s32.totalorder %s29, %s45
      %p47 = scmp.eq.s32.totalorder %s21, 0
      %p48 = por %p46, %p47
      %s50 = sadd.s32 %s49, 1
      %p53 = scmp.eq.s32.totalorder %s15, 1
      %p54 = scmp.ne.s32.totalorder %s49, %s51
      %p55 = scmp.eq.s32.totalorder %s15, 0
      %p56 = por %p54, %p55
      %p57 = scmp.ne.s32.totalorder %s49, %s51
      %p58 = scmp.eq.s32.totalorder %s20, 1
      %p59 = por %p57, %p58
      %p60 = scmp.ne.s32.totalorder %s51, %s52
      %p61 = scmp.eq.s32.totalorder %s20, 0
      %p62 = por %p60, %p61
      %p63 = scmp.ne.s32.totalorder %s51, %s52
      %p64 = scmp.eq.s32.totalorder %s21, 1
      %p65 = por %p63, %p64
      %p67 = scmp.ne.s32.totalorder %s52, %s66
      %p68 = scmp.eq.s32.totalorder %s21, 0
      %p69 = por %p67, %p68
      %s70 = ssub.s32 %s15, %s22
      %p71 = scmp.eq.s32.totalorder %s70, 0
      %s73 = sadd.s32 %s72, 1
      %s74 = scalar_select %p71, %s72, %s73
      %p77 = pneg %p71
      %p78 = scmp.eq.s32.totalorder %s15, 1
      %p79 = por %p77, %p78
      %p80 = scmp.ne.s32.totalorder %s72, %s75
      %p81 = scmp.eq.s32.totalorder %s15, 0
      %p82 = por %p80, %p81
      %p83 = scmp.ne.s32.totalorder %s72, %s75
      %p84 = scmp.eq.s32.totalorder %s20, 1
      %p85 = por %p83, %p84
      %p86 = scmp.ne.s32.totalorder %s75, %s76
      %p87 = scmp.eq.s32.totalorder %s20, 0
      %p88 = por %p86, %p87
      %p89 = scmp.ne.s32.totalorder %s75, %s76
      %p90 = scmp.eq.s32.totalorder %s21, 1
      %p91 = por %p89, %p90
      %p93 = scmp.ne.s32.totalorder %s76, %s92
      %p94 = scmp.eq.s32.totalorder %s21, 0
      %p95 = por %p93, %p94
      %p96 = scmp.le.s32.totalorder 1, %s15
      %p97 = scmp.lt.s32.totalorder %s15, 3
      %p98 = pnand %p96, %p97
      %p99 = pneg %p98
      // Predicated region
      $region9: #{tpu_custom_call.1} parent=5 // pred_check
        _
      $region10: #{tpu_custom_call.1} parent=5 // pred_check_branch
        %101 = sbr.rel (%p98) target = $region12
      $region11: #{tpu_custom_call.1} parent=5 // pred_region
        %s102 = ssub.s32 %s15, 1
        // Predicated region
        $region13: #{tpu_custom_call.1} parent=11 // pred_check
          %p103 = pneg %p62
        $region14: #{tpu_custom_call.1} parent=11 // pred_check_branch
          %105 = sbr.rel (%p103) target = $region16
        $region15: #{tpu_custom_call.1} parent=11 // pred_region
          %s107 = ssub.s32 64, 64
          %108 = vsyncadd [#allocation6], %s107
          %s110 = sshll.u32 [#allocation5], 4
          %s111 = int_to_ptr.vmem [resolvable:$true] %s110
          %113 = dma.hbm_to_vmem [thread:$0]  %s1, 64, %s111, [#allocation6]
        $region16: #{tpu_custom_call.1} parent=11 // pred_fallthru
          _
      $region12: #{tpu_custom_call.1} parent=5 // pred_fallthru
        _
      %p114 = scmp.lt.s32.totalorder %s15, 2
      // Predicated region
      $region17: #{tpu_custom_call.1} parent=5 // pred_check
        %p115 = pneg %p114
      $region18: #{tpu_custom_call.1} parent=5 // pred_check_branch
        %117 = sbr.rel (%p115) target = $region20
      $region19: #{tpu_custom_call.1} parent=5 // pred_region
        // Predicated region
        $region21: #{tpu_custom_call.1} parent=19 // pred_check
          %p118 = pneg %p35
        $region22: #{tpu_custom_call.1} parent=19 // pred_check_branch
          %120 = sbr.rel (%p118) target = $region24
        $region23: #{tpu_custom_call.1} parent=19 // pred_region
          %s121 = sand.u32 %s25, 1
          %s122 = scalar_lea.sflag [#allocation3], %s121
          %s123 = sand.u32 %s25, 1
          %s124 = smul.addr %s123, 4
          %s125 = scalar_lea.vmem [#allocation2], %s124
          %s127 = ssub.s32 64, 64
          %128 = vsyncadd %s122, %s127
          %s129 = smul.addr %s15, 2
          %s130 = smul.addr %s129, 32
          %s131 = scalar_lea.hbm %s0, %s130
          %s133 = sshll.u32 %s125, 4
          %s134 = int_to_ptr.vmem [resolvable:$true] %s133
          %136 = dma.hbm_to_vmem [thread:$0]  %s131, 64, %s134, %s122
        $region24: #{tpu_custom_call.1} parent=19 // pred_fallthru
          _
      $region20: #{tpu_custom_call.1} parent=5 // pred_fallthru
        _
      %p137 = scmp.le.s32.totalorder 1, %s15
      %p138 = scmp.lt.s32.totalorder %s15, 3
      %p139 = pnand %p137, %p138
      %p140 = pneg %p139
      // Predicated region
      $region25: #{tpu_custom_call.1} parent=5 // pred_check
        _
      $region26: #{tpu_custom_call.1} parent=5 // pred_check_branch
        %142 = sbr.rel (%p139) target = $region28
      $region27: #{tpu_custom_call.1} parent=5 // pred_region
        %s143 = ssub.s32 %s15, 1
        %s144 = sand.u32 %s28, 1
        %s145 = scalar_lea.sflag [#allocation3], %s144
        %s146 = sand.u32 %s28, 1
        %s147 = smul.addr %s146, 4
        %s148 = scalar_lea.vmem [#allocation2], %s147
        // Predicated region
        $region29: #{tpu_custom_call.1} parent=27 // pred_check
          %p149 = pneg %p41
        $region30: #{tpu_custom_call.1} parent=27 // pred_check_branch
          %151 = sbr.rel (%p149) target = $region32
        $region31: #{tpu_custom_call.1} parent=27 // pred_region
          %152 = dma.done %s145, 64
        $region32: #{tpu_custom_call.1} parent=27 // pred_fallthru
          _
        // Predicated region
        $region33: #{tpu_custom_call.1} parent=27 // pred_check
          %p153 = pneg %p62
        $region34: #{tpu_custom_call.1} parent=27 // pred_check_branch
          %155 = sbr.rel (%p153) target = $region36
        $region35: #{tpu_custom_call.1} parent=27 // pred_region
          %156 = dma.done [#allocation6], 64
        $region36: #{tpu_custom_call.1} parent=27 // pred_fallthru
          _
        %s157 = sand.u32 %s28, 1
        %s158 = scalar_lea.sflag [#allocation3], %s157
        %s159 = sand.u32 %s28, 1
        %s160 = smul.addr %s159, 4
        %s161 = scalar_lea.vmem [#allocation2], %s160
        %p162 = pneg %p41
        %p163 = pneg %p38
        %p164 = pneg %p62
        %p165 = pneg %p59
        %p166 = pneg %p88
        %p167 = pneg %p85
        %s168 = sand.u32 %s75, 1
        %s169 = scalar_lea.sflag [#allocation4], %s168
        %s170 = sand.u32 %s75, 1
        %s171 = smul.addr %s170, 4
        %s172 = scalar_lea.vmem [#allocation7], %s171
        %v174 = vld [vmem:[%s148] sm:$0xf]
        %v175 = vmul.f32 %v174, 0.0078125
        %v176 = vld [vmem:[#allocation5] sm:$0xf]
        %v177 = vlaneseq
        %v178 = vshrl.u32 %v177, 7
        %v179 = vadd.s32 %v178, 8
        %v180 = vadd.s32 %v178, 16
        %v181 = vadd.s32 %v178, 24
        %v182 = vadd.s32 %v178, 32
        %v183 = vadd.s32 %v178, 40
        %v184 = vadd.s32 %v178, 48
        %v185 = vadd.s32 %v178, 56
        %v186 = vadd.s32 %v178, 64
        %v187 = vadd.s32 %v178, 72
        %v188 = vadd.s32 %v178, 80
        %v189 = vadd.s32 %v178, 88
        %v190 = vadd.s32 %v178, 96
        %v191 = vadd.s32 %v178, 104
        %v192 = vadd.s32 %v178, 112
        %v193 = vadd.s32 %v178, 120
        loop: start=0, step=1, limit=7
        $region37: #{tpu_custom_call.1} parent=27 // loop_pre_header
          _
        $region38: #{tpu_custom_call.1} parent=27 // loop_header
          %s195 = sphi 0, %s199
          %p196 = scmp.ge.s32.totalorder %s195, 7
          %v200 = vphi %v175, %v1820
        $region39: #{tpu_custom_call.1} parent=27 // loop_header_branch
          %198 = sbr.rel (%p196) target = $region43
        $region40: #{tpu_custom_call.1} parent=27 // loop_body
          %v201 = vadd.f32 %v176, %v200
          %v202 = vfloor.f32 %v201
          %v203 = vadd.f32 %v202, 1.0
          %v204 = vsub.f32 %v201, %v202
          %v205 = vsub.f32 1.0, %v204
          %vm206 = vcmp.ge.f32.partialorder %v202, 0.0
          %v208 = vcombine.low 15.0, 15.0
          %v210 = vunpack.c.l.s4 1983009808
          %v211 = vunpack.c.0.s8 %v210
          %v212 = vlaneseq
          %v213 = vshrl.u32 %v212, 7
          %v214 = vsub.s32 %v211, %v213
          %v215 = vrot.slane %v208, %v214
          %vm217 = vcmp.le.f32.partialorder %v202, %v215
          %vm218 = vmand %vm206, %vm217
          %v219 = vsel %vm218, 1, 0
          %v220 = vcvt.s32.f32 %v219
          %vm221 = vcmp.ge.f32.partialorder %v203, 0.0
          %vm222 = vcmp.le.f32.partialorder %v203, %v215
          %vm223 = vmand %vm221, %vm222
          %v224 = vsel %vm223, 1, 0
          %v225 = vcvt.s32.f32 %v224
          %v226 = vmax.f32 %v202, 0.0
          %v229 = vunpack.c.l.s4 1983009808
          %v230 = vunpack.c.0.s8 %v229
          %v231 = vlaneseq
          %v232 = vshrl.u32 %v231, 7
          %v233 = vsub.s32 %v230, %v232
          %v234 = vrot.slane %v226, %v233
          %v235 = vcombine.high %v234, %v234
          %v238 = vmin.f32 %v234, 15.0
          %v239 = vmin.f32 %v235, 15.0
          %v240 = vcvt.f32.s32.to.zero.pseudo %v238
          %v241 = vcvt.f32.s32.to.zero.pseudo %v239
          %v242 = vmax.f32 %v203, 0.0
          %v245 = vunpack.c.l.s4 1983009808
          %v246 = vunpack.c.0.s8 %v245
          %v247 = vlaneseq
          %v248 = vshrl.u32 %v247, 7
          %v249 = vsub.s32 %v246, %v248
          %v250 = vrot.slane %v242, %v249
          %v251 = vcombine.high %v250, %v250
          %v254 = vmin.f32 %v250, 15.0
          %v255 = vmin.f32 %v251, 15.0
          %v256 = vcvt.f32.s32.to.zero.pseudo %v254
          %v257 = vcvt.f32.s32.to.zero.pseudo %v255
          %v258 = vmul.u32 %v240, 16
          %v259 = vmul.u32 %v241, 16
          %v260 = vrot.slane %v240, 1
          %v261 = vrot.slane %v241, 1
          %v262 = vadd.s32 %v258, %v260
          %v263 = vadd.s32 %v259, %v261
          %v264 = vrot.slane %v256, 1
          %v265 = vrot.slane %v257, 1
          %v266 = vadd.s32 %v258, %v264
          %v267 = vadd.s32 %v259, %v265
          %v268 = vmul.u32 %v256, 16
          %v269 = vmul.u32 %v257, 16
          %v270 = vadd.s32 %v268, %v260
          %v271 = vadd.s32 %v269, %v261
          %v272 = vadd.s32 %v268, %v264
          %v273 = vadd.s32 %v269, %v265
          %v275 = vrot.slane %v205, 7
          %v276 = vrot.slane %v275, 2
          %v278 = vmul.f32 %v205, %v276
          %v279 = vmul.f32 %v278, %v220
          %v281 = vrot.slane %v220, 7
          %v282 = vrot.slane %v281, 2
          %v284 = vmul.f32 %v279, %v282
          %v286 = vrot.slane %v204, 7
          %v287 = vrot.slane %v286, 2
          %v289 = vmul.f32 %v205, %v287
          %v290 = vmul.f32 %v289, %v220
          %v292 = vrot.slane %v225, 7
          %v293 = vrot.slane %v292, 2
          %v295 = vmul.f32 %v290, %v293
          %v296 = vmul.f32 %v204, %v276
          %v297 = vmul.f32 %v296, %v225
          %v298 = vmul.f32 %v297, %v282
          %v299 = vmul.f32 %v204, %v287
          %v300 = vmul.f32 %v299, %v225
          %v301 = vmul.f32 %v300, %v293
          %v304 = vunpack.c.l.s4 1983009808
          %v305 = vunpack.c.0.s8 %v304
          %v306 = vlaneseq
          %v307 = vshrl.u32 %v306, 7
          %v308 = vsub.s32 %v305, %v307
          %v309 = vrot.slane %v200, %v308
          %v310 = vcombine.high %v309, %v309
          %v313 = vpack.c.bf16 %v309, %v309
          %v314 = vpack.c.bf16 %v310, %v310
          %v315 = vunpack.c.l.bf16 %v313
          %v316 = vunpack.c.l.bf16 %v314
          %v319 = vcombine.low %v315, %v316
          %v321 = vunpack.c.l.s4 1983009808
          %v322 = vunpack.c.0.s8 %v321
          %v323 = vlaneseq
          %v324 = vshrl.u32 %v323, 7
          %v325 = vsub.s32 %v322, %v324
          %v326 = vrot.slane %v319, %v325
          %v328 = vsub.f32 %v200, %v326
          %v331 = vunpack.c.l.s4 1983009808
          %v332 = vunpack.c.0.s8 %v331
          %v333 = vlaneseq
          %v334 = vshrl.u32 %v333, 7
          %v335 = vsub.s32 %v332, %v334
          %v336 = vrot.slane %v328, %v335
          %v337 = vcombine.high %v336, %v336
          %v340 = vpack.c.bf16 %v336, %v336
          %v341 = vpack.c.bf16 %v337, %v337
          %v342 = vunpack.c.l.bf16 %v340
          %v343 = vunpack.c.l.bf16 %v341
          %v346 = vcombine.low %v342, %v343
          %v348 = vunpack.c.l.s4 1983009808
          %v349 = vunpack.c.0.s8 %v348
          %v350 = vlaneseq
          %v351 = vshrl.u32 %v350, 7
          %v352 = vsub.s32 %v349, %v351
          %v353 = vrot.slane %v346, %v352
          %v355 = vsub.f32 %v328, %v353
          %v358 = vunpack.c.l.s4 1983009808
          %v359 = vunpack.c.0.s8 %v358
          %v360 = vlaneseq
          %v361 = vshrl.u32 %v360, 7
          %v362 = vsub.s32 %v359, %v361
          %v363 = vrot.slane %v355, %v362
          %v364 = vcombine.high %v363, %v363
          %v367 = vpack.c.bf16 %v363, %v363
          %v368 = vpack.c.bf16 %v364, %v364
          %v371 = vrot.slane %v340, 7
          %v372 = vrot.slane %v341, 7
          %v375 = vrot.slane %v367, 6
          %v376 = vrot.slane %v368, 6
          %vm377 = vcmask 1040384
          %v380 = vsel %vm377, %v313, %v371
          %v383 = vsel %vm377, %v314, %v372
          %vm384 = vcmask 1041408
          %v386 = vsel %vm384, %v380, %v375
          %v389 = vsel %vm384, %v383, %v376
          %v391 = vlaneseq
          %v392 = vshrl.u32 %v391, 7
          %v393 = vsub.s32 0, %v392
          %v394 = vrot.slane %v262, %v393
          %v395 = vlaneseq
          %v396 = vshrl.u32 %v395, 7
          %v397 = vsub.s32 0, %v396
          %v398 = vrot.slane %v263, %v397
          %vm399 = vcmp.eq.s32.totalorder %v178, %v394
          %vm400 = vcmp.eq.s32.totalorder %v178, %v398
          %vm401 = vcmp.eq.s32.totalorder %v179, %v394
          %vm402 = vcmp.eq.s32.totalorder %v179, %v398
          %vm403 = vcmp.eq.s32.totalorder %v180, %v394
          %vm404 = vcmp.eq.s32.totalorder %v180, %v398
          %vm405 = vcmp.eq.s32.totalorder %v181, %v394
          %vm406 = vcmp.eq.s32.totalorder %v181, %v398
          %vm407 = vcmp.eq.s32.totalorder %v182, %v394
          %vm408 = vcmp.eq.s32.totalorder %v182, %v398
          %vm409 = vcmp.eq.s32.totalorder %v183, %v394
          %vm410 = vcmp.eq.s32.totalorder %v183, %v398
          %vm411 = vcmp.eq.s32.totalorder %v184, %v394
          %vm412 = vcmp.eq.s32.totalorder %v184, %v398
          %vm413 = vcmp.eq.s32.totalorder %v185, %v394
          %vm414 = vcmp.eq.s32.totalorder %v185, %v398
          %vm415 = vcmp.eq.s32.totalorder %v186, %v394
          %vm416 = vcmp.eq.s32.totalorder %v186, %v398
          %vm417 = vcmp.eq.s32.totalorder %v187, %v394
          %vm418 = vcmp.eq.s32.totalorder %v187, %v398
          %vm419 = vcmp.eq.s32.totalorder %v188, %v394
          %vm420 = vcmp.eq.s32.totalorder %v188, %v398
          %vm421 = vcmp.eq.s32.totalorder %v189, %v394
          %vm422 = vcmp.eq.s32.totalorder %v189, %v398
          %vm423 = vcmp.eq.s32.totalorder %v190, %v394
          %vm424 = vcmp.eq.s32.totalorder %v190, %v398
          %vm425 = vcmp.eq.s32.totalorder %v191, %v394
          %vm426 = vcmp.eq.s32.totalorder %v191, %v398
          %vm427 = vcmp.eq.s32.totalorder %v192, %v394
          %vm428 = vcmp.eq.s32.totalorder %v192, %v398
          %vm429 = vcmp.eq.s32.totalorder %v193, %v394
          %vm430 = vcmp.eq.s32.totalorder %v193, %v398
          %v431 = vsel %vm399, 1, 0
          %v432 = vsel %vm400, 1, 0
          %v433 = vsel %vm401, 1, 0
          %v434 = vsel %vm402, 1, 0
          %v435 = vsel %vm403, 1, 0
          %v436 = vsel %vm404, 1, 0
          %v437 = vsel %vm405, 1, 0
          %v438 = vsel %vm406, 1, 0
          %v439 = vsel %vm407, 1, 0
          %v440 = vsel %vm408, 1, 0
          %v441 = vsel %vm409, 1, 0
          %v442 = vsel %vm410, 1, 0
          %v443 = vsel %vm411, 1, 0
          %v444 = vsel %vm412, 1, 0
          %v445 = vsel %vm413, 1, 0
          %v446 = vsel %vm414, 1, 0
          %v447 = vsel %vm415, 1, 0
          %v448 = vsel %vm416, 1, 0
          %v449 = vsel %vm417, 1, 0
          %v450 = vsel %vm418, 1, 0
          %v451 = vsel %vm419, 1, 0
          %v452 = vsel %vm420, 1, 0
          %v453 = vsel %vm421, 1, 0
          %v454 = vsel %vm422, 1, 0
          %v455 = vsel %vm423, 1, 0
          %v456 = vsel %vm424, 1, 0
          %v457 = vsel %vm425, 1, 0
          %v458 = vsel %vm426, 1, 0
          %v459 = vsel %vm427, 1, 0
          %v460 = vsel %vm428, 1, 0
          %v461 = vsel %vm429, 1, 0
          %v462 = vsel %vm430, 1, 0
          %v463 = vcvt.s32.f32 %v431
          %v464 = vcvt.s32.f32 %v432
          %v465 = vcvt.s32.f32 %v433
          %v466 = vcvt.s32.f32 %v434
          %v467 = vcvt.s32.f32 %v435
          %v468 = vcvt.s32.f32 %v436
          %v469 = vcvt.s32.f32 %v437
          %v470 = vcvt.s32.f32 %v438
          %v471 = vcvt.s32.f32 %v439
          %v472 = vcvt.s32.f32 %v440
          %v473 = vcvt.s32.f32 %v441
          %v474 = vcvt.s32.f32 %v442
          %v475 = vcvt.s32.f32 %v443
          %v476 = vcvt.s32.f32 %v444
          %v477 = vcvt.s32.f32 %v445
          %v478 = vcvt.s32.f32 %v446
          %v479 = vcvt.s32.f32 %v447
          %v480 = vcvt.s32.f32 %v448
          %v481 = vcvt.s32.f32 %v449
          %v482 = vcvt.s32.f32 %v450
          %v483 = vcvt.s32.f32 %v451
          %v484 = vcvt.s32.f32 %v452
          %v485 = vcvt.s32.f32 %v453
          %v486 = vcvt.s32.f32 %v454
          %v487 = vcvt.s32.f32 %v455
          %v488 = vcvt.s32.f32 %v456
          %v489 = vcvt.s32.f32 %v457
          %v490 = vcvt.s32.f32 %v458
          %v491 = vcvt.s32.f32 %v459
          %v492 = vcvt.s32.f32 %v460
          %v493 = vcvt.s32.f32 %v461
          %v494 = vcvt.s32.f32 %v462
          %v495 = vpack.c.bf16 %v465, %v463
          %v496 = vpack.c.bf16 %v466, %v464
          %v497 = vpack.c.bf16 %v469, %v467
          %v498 = vpack.c.bf16 %v470, %v468
          %v499 = vpack.c.bf16 %v473, %v471
          %v500 = vpack.c.bf16 %v474, %v472
          %v501 = vpack.c.bf16 %v477, %v475
          %v502 = vpack.c.bf16 %v478, %v476
          %v503 = vpack.c.bf16 %v481, %v479
          %v504 = vpack.c.bf16 %v482, %v480
          %v505 = vpack.c.bf16 %v485, %v483
          %v506 = vpack.c.bf16 %v486, %v484
          %v507 = vpack.c.bf16 %v489, %v487
          %v508 = vpack.c.bf16 %v490, %v488
          %v509 = vpack.c.bf16 %v493, %v491
          %v510 = vpack.c.bf16 %v494, %v492
          %v511 = vadd.s32 %v178, 128
          %v512 = vadd.s32 %v179, 128
          %v513 = vadd.s32 %v180, 128
          %v514 = vadd.s32 %v181, 128
          %v515 = vadd.s32 %v182, 128
          %v516 = vadd.s32 %v183, 128
          %v517 = vadd.s32 %v184, 128
          %v518 = vadd.s32 %v185, 128
          %v519 = vadd.s32 %v186, 128
          %v520 = vadd.s32 %v187, 128
          %v521 = vadd.s32 %v188, 128
          %v522 = vadd.s32 %v189, 128
          %v523 = vadd.s32 %v190, 128
          %v524 = vadd.s32 %v191, 128
          %v525 = vadd.s32 %v192, 128
          %v526 = vadd.s32 %v193, 128
          %vm527 = vcmp.eq.s32.totalorder %v511, %v394
          %vm528 = vcmp.eq.s32.totalorder %v511, %v398
          %vm529 = vcmp.eq.s32.totalorder %v512, %v394
          %vm530 = vcmp.eq.s32.totalorder %v512, %v398
          %vm531 = vcmp.eq.s32.totalorder %v513, %v394
          %vm532 = vcmp.eq.s32.totalorder %v513, %v398
          %vm533 = vcmp.eq.s32.totalorder %v514, %v394
          %vm534 = vcmp.eq.s32.totalorder %v514, %v398
          %vm535 = vcmp.eq.s32.totalorder %v515, %v394
          %vm536 = vcmp.eq.s32.totalorder %v515, %v398
          %vm537 = vcmp.eq.s32.totalorder %v516, %v394
          %vm538 = vcmp.eq.s32.totalorder %v516, %v398
          %vm539 = vcmp.eq.s32.totalorder %v517, %v394
          %vm540 = vcmp.eq.s32.totalorder %v517, %v398
          %vm541 = vcmp.eq.s32.totalorder %v518, %v394
          %vm542 = vcmp.eq.s32.totalorder %v518, %v398
          %vm543 = vcmp.eq.s32.totalorder %v519, %v394
          %vm544 = vcmp.eq.s32.totalorder %v519, %v398
          %vm545 = vcmp.eq.s32.totalorder %v520, %v394
          %vm546 = vcmp.eq.s32.totalorder %v520, %v398
          %vm547 = vcmp.eq.s32.totalorder %v521, %v394
          %vm548 = vcmp.eq.s32.totalorder %v521, %v398
          %vm549 = vcmp.eq.s32.totalorder %v522, %v394
          %vm550 = vcmp.eq.s32.totalorder %v522, %v398
          %vm551 = vcmp.eq.s32.totalorder %v523, %v394
          %vm552 = vcmp.eq.s32.totalorder %v523, %v398
          %vm553 = vcmp.eq.s32.totalorder %v524, %v394
          %vm554 = vcmp.eq.s32.totalorder %v524, %v398
          %vm555 = vcmp.eq.s32.totalorder %v525, %v394
          %vm556 = vcmp.eq.s32.totalorder %v525, %v398
          %vm557 = vcmp.eq.s32.totalorder %v526, %v394
          %vm558 = vcmp.eq.s32.totalorder %v526, %v398
          %v559 = vsel %vm527, 1, 0
          %v560 = vsel %vm528, 1, 0
          %v561 = vsel %vm529, 1, 0
          %v562 = vsel %vm530, 1, 0
          %v563 = vsel %vm531, 1, 0
          %v564 = vsel %vm532, 1, 0
          %v565 = vsel %vm533, 1, 0
          %v566 = vsel %vm534, 1, 0
          %v567 = vsel %vm535, 1, 0
          %v568 = vsel %vm536, 1, 0
          %v569 = vsel %vm537, 1, 0
          %v570 = vsel %vm538, 1, 0
          %v571 = vsel %vm539, 1, 0
          %v572 = vsel %vm540, 1, 0
          %v573 = vsel %vm541, 1, 0
          %v574 = vsel %vm542, 1, 0
          %v575 = vsel %vm543, 1, 0
          %v576 = vsel %vm544, 1, 0
          %v577 = vsel %vm545, 1, 0
          %v578 = vsel %vm546, 1, 0
          %v579 = vsel %vm547, 1, 0
          %v580 = vsel %vm548, 1, 0
          %v581 = vsel %vm549, 1, 0
          %v582 = vsel %vm550, 1, 0
          %v583 = vsel %vm551, 1, 0
          %v584 = vsel %vm552, 1, 0
          %v585 = vsel %vm553, 1, 0
          %v586 = vsel %vm554, 1, 0
          %v587 = vsel %vm555, 1, 0
          %v588 = vsel %vm556, 1, 0
          %v589 = vsel %vm557, 1, 0
          %v590 = vsel %vm558, 1, 0
          %v591 = vcvt.s32.f32 %v559
          %v592 = vcvt.s32.f32 %v560
          %v593 = vcvt.s32.f32 %v561
          %v594 = vcvt.s32.f32 %v562
          %v595 = vcvt.s32.f32 %v563
          %v596 = vcvt.s32.f32 %v564
          %v597 = vcvt.s32.f32 %v565
          %v598 = vcvt.s32.f32 %v566
          %v599 = vcvt.s32.f32 %v567
          %v600 = vcvt.s32.f32 %v568
          %v601 = vcvt.s32.f32 %v569
          %v602 = vcvt.s32.f32 %v570
          %v603 = vcvt.s32.f32 %v571
          %v604 = vcvt.s32.f32 %v572
          %v605 = vcvt.s32.f32 %v573
          %v606 = vcvt.s32.f32 %v574
          %v607 = vcvt.s32.f32 %v575
          %v608 = vcvt.s32.f32 %v576
          %v609 = vcvt.s32.f32 %v577
          %v610 = vcvt.s32.f32 %v578
          %v611 = vcvt.s32.f32 %v579
          %v612 = vcvt.s32.f32 %v580
          %v613 = vcvt.s32.f32 %v581
          %v614 = vcvt.s32.f32 %v582
          %v615 = vcvt.s32.f32 %v583
          %v616 = vcvt.s32.f32 %v584
          %v617 = vcvt.s32.f32 %v585
          %v618 = vcvt.s32.f32 %v586
          %v619 = vcvt.s32.f32 %v587
          %v620 = vcvt.s32.f32 %v588
          %v621 = vcvt.s32.f32 %v589
          %v622 = vcvt.s32.f32 %v590
          %v623 = vpack.c.bf16 %v593, %v591
          %v624 = vpack.c.bf16 %v594, %v592
          %v625 = vpack.c.bf16 %v597, %v595
          %v626 = vpack.c.bf16 %v598, %v596
          %v627 = vpack.c.bf16 %v601, %v599
          %v628 = vpack.c.bf16 %v602, %v600
          %v629 = vpack.c.bf16 %v605, %v603
          %v630 = vpack.c.bf16 %v606, %v604
          %v631 = vpack.c.bf16 %v609, %v607
          %v632 = vpack.c.bf16 %v610, %v608
          %v633 = vpack.c.bf16 %v613, %v611
          %v634 = vpack.c.bf16 %v614, %v612
          %v635 = vpack.c.bf16 %v617, %v615
          %v636 = vpack.c.bf16 %v618, %v616
          %v637 = vpack.c.bf16 %v621, %v619
          %v638 = vpack.c.bf16 %v622, %v620
          %639 = vmatprep.subr.bf16.mxu0 %v638
          %640 = vmatpush1.bf16.msra.mxu0 %v637
          %641 = vmatprep.subr.bf16.mxu0 %v636
          %642 = vmatpush1.bf16.msra.mxu0 %v635
          %643 = vmatprep.subr.bf16.mxu0 %v634
          %644 = vmatpush1.bf16.msra.mxu0 %v633
          %645 = vmatprep.subr.bf16.mxu0 %v632
          %646 = vmatpush1.bf16.msra.mxu0 %v631
          %647 = vmatprep.subr.bf16.mxu0 %v630
          %648 = vmatpush1.bf16.msra.mxu0 %v629
          %649 = vmatprep.subr.bf16.mxu0 %v628
          %650 = vmatpush1.bf16.msra.mxu0 %v627
          %651 = vmatprep.subr.bf16.mxu0 %v626
          %652 = vmatpush1.bf16.msra.mxu0 %v625
          %653 = vmatprep.subr.bf16.mxu0 %v624
          %654 = vmatpush1.bf16.msra.mxu0 %v623
          %655 = vmatprep.subr.bf16.mxu0 0
          %656 = vmatpush2.bf16.msra.mxu0 0
          %657 = vmatprep.subr.bf16.mxu0 0
          %658 = vmatpush2.bf16.msra.mxu0 0
          %659 = vmatprep.subr.bf16.mxu0 0
          %660 = vmatpush2.bf16.msra.mxu0 0
          %661 = vmatprep.subr.bf16.mxu0 0
          %662 = vmatpush2.bf16.msra.mxu0 0
          %663 = vmatprep.subr.bf16.mxu0 0
          %664 = vmatpush2.bf16.msra.mxu0 0
          %665 = vmatprep.subr.bf16.mxu0 0
          %666 = vmatpush2.bf16.msra.mxu0 0
          %667 = vmatprep.subr.bf16.mxu0 0
          %668 = vmatpush2.bf16.msra.mxu0 0
          %669 = vmatprep.subr.bf16.mxu0 0
          %670 = vmatpush2.bf16.msra.mxu0 0
          %671 = vmatprep.mubr.bf16.mxu0 0
          %672 = vmatmul.mubr.bf16.gmra.mxu0 %v389
          %v673 = vpop.f32.mrf.mxu0
          %v674 = vadd.f32 0.0, %v673
          %v675 = vpop.f32.mrf.mxu0
          %v676 = vadd.f32 0.0, %v675
          %v677 = vpop.f32.mrf.mxu0
          %v678 = vpop.f32.mrf.mxu0
          %679 = vdwg.mxu0
          %680 = vmatprep.subr.bf16.mxu0 %v510
          %681 = vmatpush1.bf16.msra.mxu0 %v509
          %682 = vmatprep.subr.bf16.mxu0 %v508
          %683 = vmatpush1.bf16.msra.mxu0 %v507
          %684 = vmatprep.subr.bf16.mxu0 %v506
          %685 = vmatpush1.bf16.msra.mxu0 %v505
          %686 = vmatprep.subr.bf16.mxu0 %v504
          %687 = vmatpush1.bf16.msra.mxu0 %v503
          %688 = vmatprep.subr.bf16.mxu0 %v502
          %689 = vmatpush1.bf16.msra.mxu0 %v501
          %690 = vmatprep.subr.bf16.mxu0 %v500
          %691 = vmatpush1.bf16.msra.mxu0 %v499
          %692 = vmatprep.subr.bf16.mxu0 %v498
          %693 = vmatpush1.bf16.msra.mxu0 %v497
          %694 = vmatprep.subr.bf16.mxu0 %v496
          %695 = vmatpush1.bf16.msra.mxu0 %v495
          %696 = vmatprep.subr.bf16.mxu0 0
          %697 = vmatpush2.bf16.msra.mxu0 0
          %698 = vmatprep.subr.bf16.mxu0 0
          %699 = vmatpush2.bf16.msra.mxu0 0
          %700 = vmatprep.subr.bf16.mxu0 0
          %701 = vmatpush2.bf16.msra.mxu0 0
          %702 = vmatprep.subr.bf16.mxu0 0
          %703 = vmatpush2.bf16.msra.mxu0 0
          %704 = vmatprep.subr.bf16.mxu0 0
          %705 = vmatpush2.bf16.msra.mxu0 0
          %706 = vmatprep.subr.bf16.mxu0 0
          %707 = vmatpush2.bf16.msra.mxu0 0
          %708 = vmatprep.subr.bf16.mxu0 0
          %709 = vmatpush2.bf16.msra.mxu0 0
          %710 = vmatprep.subr.bf16.mxu0 0
          %711 = vmatpush2.bf16.msra.mxu0 0
          %712 = vmatprep.mubr.bf16.mxu0 0
          %713 = vmatmul.mubr.bf16.gmra.mxu0 %v386
          %v714 = vpop.f32.mrf.mxu0
          %v715 = vadd.f32 %v674, %v714
          %v716 = vpop.f32.mrf.mxu0
          %v717 = vadd.f32 %v676, %v716
          %v718 = vpop.f32.mrf.mxu0
          %v719 = vpop.f32.mrf.mxu0
          %720 = vdwg.mxu0
          %v723 = vrot.slane %v715, 2
          %v724 = vrot.slane %v717, 2
          %v727 = vadd.f32 %v715, %v723
          %v728 = vadd.f32 %v717, %v724
          %v729 = vrot.slane %v715, 4
          %v730 = vrot.slane %v717, 4
          %v733 = vadd.f32 %v727, %v729
          %v734 = vadd.f32 %v728, %v730
          %v736 = vlaneseq
          %v737 = vshrl.u32 %v736, 7
          %v738 = vsub.s32 0, %v737
          %v739 = vrot.slane %v284, %v738
          %v740 = vlaneseq
          %v741 = vshrl.u32 %v740, 7
          %v742 = vsub.s32 2, %v741
          %v743 = vrot.slane %v284, %v742
          %v746 = vlaneseq
          %v747 = vshrl.u32 %v746, 7
          %v748 = vsub.s32 0, %v747
          %v749 = vrot.slane %v739, %v748
          %v750 = vlaneseq
          %v751 = vshrl.u32 %v750, 7
          %v752 = vsub.s32 0, %v751
          %v753 = vrot.slane %v743, %v752
          %v754 = vmul.f32 %v749, %v733
          %v755 = vmul.f32 %v753, %v734
          %v756 = vlaneseq
          %v757 = vshrl.u32 %v756, 7
          %v758 = vsub.s32 0, %v757
          %v759 = vrot.slane %v266, %v758
          %v760 = vlaneseq
          %v761 = vshrl.u32 %v760, 7
          %v762 = vsub.s32 0, %v761
          %v763 = vrot.slane %v267, %v762
          %vm764 = vcmp.eq.s32.totalorder %v178, %v759
          %vm765 = vcmp.eq.s32.totalorder %v178, %v763
          %vm766 = vcmp.eq.s32.totalorder %v179, %v759
          %vm767 = vcmp.eq.s32.totalorder %v179, %v763
          %vm768 = vcmp.eq.s32.totalorder %v180, %v759
          %vm769 = vcmp.eq.s32.totalorder %v180, %v763
          %vm770 = vcmp.eq.s32.totalorder %v181, %v759
          %vm771 = vcmp.eq.s32.totalorder %v181, %v763
          %vm772 = vcmp.eq.s32.totalorder %v182, %v759
          %vm773 = vcmp.eq.s32.totalorder %v182, %v763
          %vm774 = vcmp.eq.s32.totalorder %v183, %v759
          %vm775 = vcmp.eq.s32.totalorder %v183, %v763
          %vm776 = vcmp.eq.s32.totalorder %v184, %v759
          %vm777 = vcmp.eq.s32.totalorder %v184, %v763
          %vm778 = vcmp.eq.s32.totalorder %v185, %v759
          %vm779 = vcmp.eq.s32.totalorder %v185, %v763
          %vm780 = vcmp.eq.s32.totalorder %v186, %v759
          %vm781 = vcmp.eq.s32.totalorder %v186, %v763
          %vm782 = vcmp.eq.s32.totalorder %v187, %v759
          %vm783 = vcmp.eq.s32.totalorder %v187, %v763
          %vm784 = vcmp.eq.s32.totalorder %v188, %v759
          %vm785 = vcmp.eq.s32.totalorder %v188, %v763
          %vm786 = vcmp.eq.s32.totalorder %v189, %v759
          %vm787 = vcmp.eq.s32.totalorder %v189, %v763
          %vm788 = vcmp.eq.s32.totalorder %v190, %v759
          %vm789 = vcmp.eq.s32.totalorder %v190, %v763
          %vm790 = vcmp.eq.s32.totalorder %v191, %v759
          %vm791 = vcmp.eq.s32.totalorder %v191, %v763
          %vm792 = vcmp.eq.s32.totalorder %v192, %v759
          %vm793 = vcmp.eq.s32.totalorder %v192, %v763
          %vm794 = vcmp.eq.s32.totalorder %v193, %v759
          %vm795 = vcmp.eq.s32.totalorder %v193, %v763
          %v796 = vsel %vm764, 1, 0
          %v797 = vsel %vm765, 1, 0
          %v798 = vsel %vm766, 1, 0
          %v799 = vsel %vm767, 1, 0
          %v800 = vsel %vm768, 1, 0
          %v801 = vsel %vm769, 1, 0
          %v802 = vsel %vm770, 1, 0
          %v803 = vsel %vm771, 1, 0
          %v804 = vsel %vm772, 1, 0
          %v805 = vsel %vm773, 1, 0
          %v806 = vsel %vm774, 1, 0
          %v807 = vsel %vm775, 1, 0
          %v808 = vsel %vm776, 1, 0
          %v809 = vsel %vm777, 1, 0
          %v810 = vsel %vm778, 1, 0
          %v811 = vsel %vm779, 1, 0
          %v812 = vsel %vm780, 1, 0
          %v813 = vsel %vm781, 1, 0
          %v814 = vsel %vm782, 1, 0
          %v815 = vsel %vm783, 1, 0
          %v816 = vsel %vm784, 1, 0
          %v817 = vsel %vm785, 1, 0
          %v818 = vsel %vm786, 1, 0
          %v819 = vsel %vm787, 1, 0
          %v820 = vsel %vm788, 1, 0
          %v821 = vsel %vm789, 1, 0
          %v822 = vsel %vm790, 1, 0
          %v823 = vsel %vm791, 1, 0
          %v824 = vsel %vm792, 1, 0
          %v825 = vsel %vm793, 1, 0
          %v826 = vsel %vm794, 1, 0
          %v827 = vsel %vm795, 1, 0
          %v828 = vcvt.s32.f32 %v796
          %v829 = vcvt.s32.f32 %v797
          %v830 = vcvt.s32.f32 %v798
          %v831 = vcvt.s32.f32 %v799
          %v832 = vcvt.s32.f32 %v800
          %v833 = vcvt.s32.f32 %v801
          %v834 = vcvt.s32.f32 %v802
          %v835 = vcvt.s32.f32 %v803
          %v836 = vcvt.s32.f32 %v804
          %v837 = vcvt.s32.f32 %v805
          %v838 = vcvt.s32.f32 %v806
          %v839 = vcvt.s32.f32 %v807
          %v840 = vcvt.s32.f32 %v808
          %v841 = vcvt.s32.f32 %v809
          %v842 = vcvt.s32.f32 %v810
          %v843 = vcvt.s32.f32 %v811
          %v844 = vcvt.s32.f32 %v812
          %v845 = vcvt.s32.f32 %v813
          %v846 = vcvt.s32.f32 %v814
          %v847 = vcvt.s32.f32 %v815
          %v848 = vcvt.s32.f32 %v816
          %v849 = vcvt.s32.f32 %v817
          %v850 = vcvt.s32.f32 %v818
          %v851 = vcvt.s32.f32 %v819
          %v852 = vcvt.s32.f32 %v820
          %v853 = vcvt.s32.f32 %v821
          %v854 = vcvt.s32.f32 %v822
          %v855 = vcvt.s32.f32 %v823
          %v856 = vcvt.s32.f32 %v824
          %v857 = vcvt.s32.f32 %v825
          %v858 = vcvt.s32.f32 %v826
          %v859 = vcvt.s32.f32 %v827
          %v860 = vpack.c.bf16 %v830, %v828
          %v861 = vpack.c.bf16 %v831, %v829
          %v862 = vpack.c.bf16 %v834, %v832
          %v863 = vpack.c.bf16 %v835, %v833
          %v864 = vpack.c.bf16 %v838, %v836
          %v865 = vpack.c.bf16 %v839, %v837
          %v866 = vpack.c.bf16 %v842, %v840
          %v867 = vpack.c.bf16 %v843, %v841
          %v868 = vpack.c.bf16 %v846, %v844
          %v869 = vpack.c.bf16 %v847, %v845
          %v870 = vpack.c.bf16 %v850, %v848
          %v871 = vpack.c.bf16 %v851, %v849
          %v872 = vpack.c.bf16 %v854, %v852
          %v873 = vpack.c.bf16 %v855, %v853
          %v874 = vpack.c.bf16 %v858, %v856
          %v875 = vpack.c.bf16 %v859, %v857
          %vm876 = vcmp.eq.s32.totalorder %v511, %v759
          %vm877 = vcmp.eq.s32.totalorder %v511, %v763
          %vm878 = vcmp.eq.s32.totalorder %v512, %v759
          %vm879 = vcmp.eq.s32.totalorder %v512, %v763
          %vm880 = vcmp.eq.s32.totalorder %v513, %v759
          %vm881 = vcmp.eq.s32.totalorder %v513, %v763
          %vm882 = vcmp.eq.s32.totalorder %v514, %v759
          %vm883 = vcmp.eq.s32.totalorder %v514, %v763
          %vm884 = vcmp.eq.s32.totalorder %v515, %v759
          %vm885 = vcmp.eq.s32.totalorder %v515, %v763
          %vm886 = vcmp.eq.s32.totalorder %v516, %v759
          %vm887 = vcmp.eq.s32.totalorder %v516, %v763
          %vm888 = vcmp.eq.s32.totalorder %v517, %v759
          %vm889 = vcmp.eq.s32.totalorder %v517, %v763
          %vm890 = vcmp.eq.s32.totalorder %v518, %v759
          %vm891 = vcmp.eq.s32.totalorder %v518, %v763
          %vm892 = vcmp.eq.s32.totalorder %v519, %v759
          %vm893 = vcmp.eq.s32.totalorder %v519, %v763
          %vm894 = vcmp.eq.s32.totalorder %v520, %v759
          %vm895 = vcmp.eq.s32.totalorder %v520, %v763
          %vm896 = vcmp.eq.s32.totalorder %v521, %v759
          %vm897 = vcmp.eq.s32.totalorder %v521, %v763
          %vm898 = vcmp.eq.s32.totalorder %v522, %v759
          %vm899 = vcmp.eq.s32.totalorder %v522, %v763
          %vm900 = vcmp.eq.s32.totalorder %v523, %v759
          %vm901 = vcmp.eq.s32.totalorder %v523, %v763
          %vm902 = vcmp.eq.s32.totalorder %v524, %v759
          %vm903 = vcmp.eq.s32.totalorder %v524, %v763
          %vm904 = vcmp.eq.s32.totalorder %v525, %v759
          %vm905 = vcmp.eq.s32.totalorder %v525, %v763
          %vm906 = vcmp.eq.s32.totalorder %v526, %v759
          %vm907 = vcmp.eq.s32.totalorder %v526, %v763
          %v908 = vsel %vm876, 1, 0
          %v909 = vsel %vm877, 1, 0
          %v910 = vsel %vm878, 1, 0
          %v911 = vsel %vm879, 1, 0
          %v912 = vsel %vm880, 1, 0
          %v913 = vsel %vm881, 1, 0
          %v914 = vsel %vm882, 1, 0
          %v915 = vsel %vm883, 1, 0
          %v916 = vsel %vm884, 1, 0
          %v917 = vsel %vm885, 1, 0
          %v918 = vsel %vm886, 1, 0
          %v919 = vsel %vm887, 1, 0
          %v920 = vsel %vm888, 1, 0
          %v921 = vsel %vm889, 1, 0
          %v922 = vsel %vm890, 1, 0
          %v923 = vsel %vm891, 1, 0
          %v924 = vsel %vm892, 1, 0
          %v925 = vsel %vm893, 1, 0
          %v926 = vsel %vm894, 1, 0
          %v927 = vsel %vm895, 1, 0
          %v928 = vsel %vm896, 1, 0
          %v929 = vsel %vm897, 1, 0
          %v930 = vsel %vm898, 1, 0
          %v931 = vsel %vm899, 1, 0
          %v932 = vsel %vm900, 1, 0
          %v933 = vsel %vm901, 1, 0
          %v934 = vsel %vm902, 1, 0
          %v935 = vsel %vm903, 1, 0
          %v936 = vsel %vm904, 1, 0
          %v937 = vsel %vm905, 1, 0
          %v938 = vsel %vm906, 1, 0
          %v939 = vsel %vm907, 1, 0
          %v940 = vcvt.s32.f32 %v908
          %v941 = vcvt.s32.f32 %v909
          %v942 = vcvt.s32.f32 %v910
          %v943 = vcvt.s32.f32 %v911
          %v944 = vcvt.s32.f32 %v912
          %v945 = vcvt.s32.f32 %v913
          %v946 = vcvt.s32.f32 %v914
          %v947 = vcvt.s32.f32 %v915
          %v948 = vcvt.s32.f32 %v916
          %v949 = vcvt.s32.f32 %v917
          %v950 = vcvt.s32.f32 %v918
          %v951 = vcvt.s32.f32 %v919
          %v952 = vcvt.s32.f32 %v920
          %v953 = vcvt.s32.f32 %v921
          %v954 = vcvt.s32.f32 %v922
          %v955 = vcvt.s32.f32 %v923
          %v956 = vcvt.s32.f32 %v924
          %v957 = vcvt.s32.f32 %v925
          %v958 = vcvt.s32.f32 %v926
          %v959 = vcvt.s32.f32 %v927
          %v960 = vcvt.s32.f32 %v928
          %v961 = vcvt.s32.f32 %v929
          %v962 = vcvt.s32.f32 %v930
          %v963 = vcvt.s32.f32 %v931
          %v964 = vcvt.s32.f32 %v932
          %v965 = vcvt.s32.f32 %v933
          %v966 = vcvt.s32.f32 %v934
          %v967 = vcvt.s32.f32 %v935
          %v968 = vcvt.s32.f32 %v936
          %v969 = vcvt.s32.f32 %v937
          %v970 = vcvt.s32.f32 %v938
          %v971 = vcvt.s32.f32 %v939
          %v972 = vpack.c.bf16 %v942, %v940
          %v973 = vpack.c.bf16 %v943, %v941
          %v974 = vpack.c.bf16 %v946, %v944
          %v975 = vpack.c.bf16 %v947, %v945
          %v976 = vpack.c.bf16 %v950, %v948
          %v977 = vpack.c.bf16 %v951, %v949
          %v978 = vpack.c.bf16 %v954, %v952
          %v979 = vpack.c.bf16 %v955, %v953
          %v980 = vpack.c.bf16 %v958, %v956
          %v981 = vpack.c.bf16 %v959, %v957
          %v982 = vpack.c.bf16 %v962, %v960
          %v983 = vpack.c.bf16 %v963, %v961
          %v984 = vpack.c.bf16 %v966, %v964
          %v985 = vpack.c.bf16 %v967, %v965
          %v986 = vpack.c.bf16 %v970, %v968
          %v987 = vpack.c.bf16 %v971, %v969
          %988 = vmatprep.subr.bf16.mxu0 %v987
          %989 = vmatpush1.bf16.msra.mxu0 %v986
          %990 = vmatprep.subr.bf16.mxu0 %v985
          %991 = vmatpush1.bf16.msra.mxu0 %v984
          %992 = vmatprep.subr.bf16.mxu0 %v983
          %993 = vmatpush1.bf16.msra.mxu0 %v982
          %994 = vmatprep.subr.bf16.mxu0 %v981
          %995 = vmatpush1.bf16.msra.mxu0 %v980
          %996 = vmatprep.subr.bf16.mxu0 %v979
          %997 = vmatpush1.bf16.msra.mxu0 %v978
          %998 = vmatprep.subr.bf16.mxu0 %v977
          %999 = vmatpush1.bf16.msra.mxu0 %v976
          %1000 = vmatprep.subr.bf16.mxu0 %v975
          %1001 = vmatpush1.bf16.msra.mxu0 %v974
          %1002 = vmatprep.subr.bf16.mxu0 %v973
          %1003 = vmatpush1.bf16.msra.mxu0 %v972
          %1004 = vmatprep.subr.bf16.mxu0 0
          %1005 = vmatpush2.bf16.msra.mxu0 0
          %1006 = vmatprep.subr.bf16.mxu0 0
          %1007 = vmatpush2.bf16.msra.mxu0 0
          %1008 = vmatprep.subr.bf16.mxu0 0
          %1009 = vmatpush2.bf16.msra.mxu0 0
          %1010 = vmatprep.subr.bf16.mxu0 0
          %1011 = vmatpush2.bf16.msra.mxu0 0
          %1012 = vmatprep.subr.bf16.mxu0 0
          %1013 = vmatpush2.bf16.msra.mxu0 0
          %1014 = vmatprep.subr.bf16.mxu0 0
          %1015 = vmatpush2.bf16.msra.mxu0 0
          %1016 = vmatprep.subr.bf16.mxu0 0
          %1017 = vmatpush2.bf16.msra.mxu0 0
          %1018 = vmatprep.subr.bf16.mxu0 0
          %1019 = vmatpush2.bf16.msra.mxu0 0
          %1020 = vmatprep.mubr.bf16.mxu0 0
          %1021 = vmatmul.mubr.bf16.gmra.mxu0 %v389
          %v1022 = vpop.f32.mrf.mxu0
          %v1023 = vadd.f32 0.0, %v1022
          %v1024 = vpop.f32.mrf.mxu0
          %v1025 = vadd.f32 0.0, %v1024
          %v1026 = vpop.f32.mrf.mxu0
          %v1027 = vpop.f32.mrf.mxu0
          %1028 = vdwg.mxu0
          %1029 = vmatprep.subr.bf16.mxu0 %v875
          %1030 = vmatpush1.bf16.msra.mxu0 %v874
          %1031 = vmatprep.subr.bf16.mxu0 %v873
          %1032 = vmatpush1.bf16.msra.mxu0 %v872
          %1033 = vmatprep.subr.bf16.mxu0 %v871
          %1034 = vmatpush1.bf16.msra.mxu0 %v870
          %1035 = vmatprep.subr.bf16.mxu0 %v869
          %1036 = vmatpush1.bf16.msra.mxu0 %v868
          %1037 = vmatprep.subr.bf16.mxu0 %v867
          %1038 = vmatpush1.bf16.msra.mxu0 %v866
          %1039 = vmatprep.subr.bf16.mxu0 %v865
          %1040 = vmatpush1.bf16.msra.mxu0 %v864
          %1041 = vmatprep.subr.bf16.mxu0 %v863
          %1042 = vmatpush1.bf16.msra.mxu0 %v862
          %1043 = vmatprep.subr.bf16.mxu0 %v861
          %1044 = vmatpush1.bf16.msra.mxu0 %v860
          %1045 = vmatprep.subr.bf16.mxu0 0
          %1046 = vmatpush2.bf16.msra.mxu0 0
          %1047 = vmatprep.subr.bf16.mxu0 0
          %1048 = vmatpush2.bf16.msra.mxu0 0
          %1049 = vmatprep.subr.bf16.mxu0 0
          %1050 = vmatpush2.bf16.msra.mxu0 0
          %1051 = vmatprep.subr.bf16.mxu0 0
          %1052 = vmatpush2.bf16.msra.mxu0 0
          %1053 = vmatprep.subr.bf16.mxu0 0
          %1054 = vmatpush2.bf16.msra.mxu0 0
          %1055 = vmatprep.subr.bf16.mxu0 0
          %1056 = vmatpush2.bf16.msra.mxu0 0
          %1057 = vmatprep.subr.bf16.mxu0 0
          %1058 = vmatpush2.bf16.msra.mxu0 0
          %1059 = vmatprep.subr.bf16.mxu0 0
          %1060 = vmatpush2.bf16.msra.mxu0 0
          %1061 = vmatprep.mubr.bf16.mxu0 0
          %1062 = vmatmul.mubr.bf16.gmra.mxu0 %v386
          %v1063 = vpop.f32.mrf.mxu0
          %v1064 = vadd.f32 %v1023, %v1063
          %v1065 = vpop.f32.mrf.mxu0
          %v1066 = vadd.f32 %v1025, %v1065
          %v1067 = vpop.f32.mrf.mxu0
          %v1068 = vpop.f32.mrf.mxu0
          %1069 = vdwg.mxu0
          %v1072 = vrot.slane %v1064, 2
          %v1073 = vrot.slane %v1066, 2
          %v1076 = vadd.f32 %v1064, %v1072
          %v1077 = vadd.f32 %v1066, %v1073
          %v1078 = vrot.slane %v1064, 4
          %v1079 = vrot.slane %v1066, 4
          %v1082 = vadd.f32 %v1076, %v1078
          %v1083 = vadd.f32 %v1077, %v1079
          %v1085 = vlaneseq
          %v1086 = vshrl.u32 %v1085, 7
          %v1087 = vsub.s32 0, %v1086
          %v1088 = vrot.slane %v295, %v1087
          %v1089 = vlaneseq
          %v1090 = vshrl.u32 %v1089, 7
          %v1091 = vsub.s32 2, %v1090
          %v1092 = vrot.slane %v295, %v1091
          %v1095 = vlaneseq
          %v1096 = vshrl.u32 %v1095, 7
          %v1097 = vsub.s32 0, %v1096
          %v1098 = vrot.slane %v1088, %v1097
          %v1099 = vlaneseq
          %v1100 = vshrl.u32 %v1099, 7
          %v1101 = vsub.s32 0, %v1100
          %v1102 = vrot.slane %v1092, %v1101
          %v1103 = vmul.f32 %v1098, %v1082
          %v1104 = vmul.f32 %v1102, %v1083
          %v1105 = vadd.f32 %v754, %v1103
          %v1106 = vadd.f32 %v755, %v1104
          %v1107 = vlaneseq
          %v1108 = vshrl.u32 %v1107, 7
          %v1109 = vsub.s32 0, %v1108
          %v1110 = vrot.slane %v270, %v1109
          %v1111 = vlaneseq
          %v1112 = vshrl.u32 %v1111, 7
          %v1113 = vsub.s32 0, %v1112
          %v1114 = vrot.slane %v271, %v1113
          %vm1115 = vcmp.eq.s32.totalorder %v178, %v1110
          %vm1116 = vcmp.eq.s32.totalorder %v178, %v1114
          %vm1117 = vcmp.eq.s32.totalorder %v179, %v1110
          %vm1118 = vcmp.eq.s32.totalorder %v179, %v1114
          %vm1119 = vcmp.eq.s32.totalorder %v180, %v1110
          %vm1120 = vcmp.eq.s32.totalorder %v180, %v1114
          %vm1121 = vcmp.eq.s32.totalorder %v181, %v1110
          %vm1122 = vcmp.eq.s32.totalorder %v181, %v1114
          %vm1123 = vcmp.eq.s32.totalorder %v182, %v1110
          %vm1124 = vcmp.eq.s32.totalorder %v182, %v1114
          %vm1125 = vcmp.eq.s32.totalorder %v183, %v1110
          %vm1126 = vcmp.eq.s32.totalorder %v183, %v1114
          %vm1127 = vcmp.eq.s32.totalorder %v184, %v1110
          %vm1128 = vcmp.eq.s32.totalorder %v184, %v1114
          %vm1129 = vcmp.eq.s32.totalorder %v185, %v1110
          %vm1130 = vcmp.eq.s32.totalorder %v185, %v1114
          %vm1131 = vcmp.eq.s32.totalorder %v186, %v1110
          %vm1132 = vcmp.eq.s32.totalorder %v186, %v1114
          %vm1133 = vcmp.eq.s32.totalorder %v187, %v1110
          %vm1134 = vcmp.eq.s32.totalorder %v187, %v1114
          %vm1135 = vcmp.eq.s32.totalorder %v188, %v1110
          %vm1136 = vcmp.eq.s32.totalorder %v188, %v1114
          %vm1137 = vcmp.eq.s32.totalorder %v189, %v1110
          %vm1138 = vcmp.eq.s32.totalorder %v189, %v1114
          %vm1139 = vcmp.eq.s32.totalorder %v190, %v1110
          %vm1140 = vcmp.eq.s32.totalorder %v190, %v1114
          %vm1141 = vcmp.eq.s32.totalorder %v191, %v1110
          %vm1142 = vcmp.eq.s32.totalorder %v191, %v1114
          %vm1143 = vcmp.eq.s32.totalorder %v192, %v1110
          %vm1144 = vcmp.eq.s32.totalorder %v192, %v1114
          %vm1145 = vcmp.eq.s32.totalorder %v193, %v1110
          %vm1146 = vcmp.eq.s32.totalorder %v193, %v1114
          %v1147 = vsel %vm1115, 1, 0
          %v1148 = vsel %vm1116, 1, 0
          %v1149 = vsel %vm1117, 1, 0
          %v1150 = vsel %vm1118, 1, 0
          %v1151 = vsel %vm1119, 1, 0
          %v1152 = vsel %vm1120, 1, 0
          %v1153 = vsel %vm1121, 1, 0
          %v1154 = vsel %vm1122, 1, 0
          %v1155 = vsel %vm1123, 1, 0
          %v1156 = vsel %vm1124, 1, 0
          %v1157 = vsel %vm1125, 1, 0
          %v1158 = vsel %vm1126, 1, 0
          %v1159 = vsel %vm1127, 1, 0
          %v1160 = vsel %vm1128, 1, 0
          %v1161 = vsel %vm1129, 1, 0
          %v1162 = vsel %vm1130, 1, 0
          %v1163 = vsel %vm1131, 1, 0
          %v1164 = vsel %vm1132, 1, 0
          %v1165 = vsel %vm1133, 1, 0
          %v1166 = vsel %vm1134, 1, 0
          %v1167 = vsel %vm1135, 1, 0
          %v1168 = vsel %vm1136, 1, 0
          %v1169 = vsel %vm1137, 1, 0
          %v1170 = vsel %vm1138, 1, 0
          %v1171 = vsel %vm1139, 1, 0
          %v1172 = vsel %vm1140, 1, 0
          %v1173 = vsel %vm1141, 1, 0
          %v1174 = vsel %vm1142, 1, 0
          %v1175 = vsel %vm1143, 1, 0
          %v1176 = vsel %vm1144, 1, 0
          %v1177 = vsel %vm1145, 1, 0
          %v1178 = vsel %vm1146, 1, 0
          %v1179 = vcvt.s32.f32 %v1147
          %v1180 = vcvt.s32.f32 %v1148
          %v1181 = vcvt.s32.f32 %v1149
          %v1182 = vcvt.s32.f32 %v1150
          %v1183 = vcvt.s32.f32 %v1151
          %v1184 = vcvt.s32.f32 %v1152
          %v1185 = vcvt.s32.f32 %v1153
          %v1186 = vcvt.s32.f32 %v1154
          %v1187 = vcvt.s32.f32 %v1155
          %v1188 = vcvt.s32.f32 %v1156
          %v1189 = vcvt.s32.f32 %v1157
          %v1190 = vcvt.s32.f32 %v1158
          %v1191 = vcvt.s32.f32 %v1159
          %v1192 = vcvt.s32.f32 %v1160
          %v1193 = vcvt.s32.f32 %v1161
          %v1194 = vcvt.s32.f32 %v1162
          %v1195 = vcvt.s32.f32 %v1163
          %v1196 = vcvt.s32.f32 %v1164
          %v1197 = vcvt.s32.f32 %v1165
          %v1198 = vcvt.s32.f32 %v1166
          %v1199 = vcvt.s32.f32 %v1167
          %v1200 = vcvt.s32.f32 %v1168
          %v1201 = vcvt.s32.f32 %v1169
          %v1202 = vcvt.s32.f32 %v1170
          %v1203 = vcvt.s32.f32 %v1171
          %v1204 = vcvt.s32.f32 %v1172
          %v1205 = vcvt.s32.f32 %v1173
          %v1206 = vcvt.s32.f32 %v1174
          %v1207 = vcvt.s32.f32 %v1175
          %v1208 = vcvt.s32.f32 %v1176
          %v1209 = vcvt.s32.f32 %v1177
          %v1210 = vcvt.s32.f32 %v1178
          %v1211 = vpack.c.bf16 %v1181, %v1179
          %v1212 = vpack.c.bf16 %v1182, %v1180
          %v1213 = vpack.c.bf16 %v1185, %v1183
          %v1214 = vpack.c.bf16 %v1186, %v1184
          %v1215 = vpack.c.bf16 %v1189, %v1187
          %v1216 = vpack.c.bf16 %v1190, %v1188
          %v1217 = vpack.c.bf16 %v1193, %v1191
          %v1218 = vpack.c.bf16 %v1194, %v1192
          %v1219 = vpack.c.bf16 %v1197, %v1195
          %v1220 = vpack.c.bf16 %v1198, %v1196
          %v1221 = vpack.c.bf16 %v1201, %v1199
          %v1222 = vpack.c.bf16 %v1202, %v1200
          %v1223 = vpack.c.bf16 %v1205, %v1203
          %v1224 = vpack.c.bf16 %v1206, %v1204
          %v1225 = vpack.c.bf16 %v1209, %v1207
          %v1226 = vpack.c.bf16 %v1210, %v1208
          %vm1227 = vcmp.eq.s32.totalorder %v511, %v1110
          %vm1228 = vcmp.eq.s32.totalorder %v511, %v1114
          %vm1229 = vcmp.eq.s32.totalorder %v512, %v1110
          %vm1230 = vcmp.eq.s32.totalorder %v512, %v1114
          %vm1231 = vcmp.eq.s32.totalorder %v513, %v1110
          %vm1232 = vcmp.eq.s32.totalorder %v513, %v1114
          %vm1233 = vcmp.eq.s32.totalorder %v514, %v1110
          %vm1234 = vcmp.eq.s32.totalorder %v514, %v1114
          %vm1235 = vcmp.eq.s32.totalorder %v515, %v1110
          %vm1236 = vcmp.eq.s32.totalorder %v515, %v1114
          %vm1237 = vcmp.eq.s32.totalorder %v516, %v1110
          %vm1238 = vcmp.eq.s32.totalorder %v516, %v1114
          %vm1239 = vcmp.eq.s32.totalorder %v517, %v1110
          %vm1240 = vcmp.eq.s32.totalorder %v517, %v1114
          %vm1241 = vcmp.eq.s32.totalorder %v518, %v1110
          %vm1242 = vcmp.eq.s32.totalorder %v518, %v1114
          %vm1243 = vcmp.eq.s32.totalorder %v519, %v1110
          %vm1244 = vcmp.eq.s32.totalorder %v519, %v1114
          %vm1245 = vcmp.eq.s32.totalorder %v520, %v1110
          %vm1246 = vcmp.eq.s32.totalorder %v520, %v1114
          %vm1247 = vcmp.eq.s32.totalorder %v521, %v1110
          %vm1248 = vcmp.eq.s32.totalorder %v521, %v1114
          %vm1249 = vcmp.eq.s32.totalorder %v522, %v1110
          %vm1250 = vcmp.eq.s32.totalorder %v522, %v1114
          %vm1251 = vcmp.eq.s32.totalorder %v523, %v1110
          %vm1252 = vcmp.eq.s32.totalorder %v523, %v1114
          %vm1253 = vcmp.eq.s32.totalorder %v524, %v1110
          %vm1254 = vcmp.eq.s32.totalorder %v524, %v1114
          %vm1255 = vcmp.eq.s32.totalorder %v525, %v1110
          %vm1256 = vcmp.eq.s32.totalorder %v525, %v1114
          %vm1257 = vcmp.eq.s32.totalorder %v526, %v1110
          %vm1258 = vcmp.eq.s32.totalorder %v526, %v1114
          %v1259 = vsel %vm1227, 1, 0
          %v1260 = vsel %vm1228, 1, 0
          %v1261 = vsel %vm1229, 1, 0
          %v1262 = vsel %vm1230, 1, 0
          %v1263 = vsel %vm1231, 1, 0
          %v1264 = vsel %vm1232, 1, 0
          %v1265 = vsel %vm1233, 1, 0
          %v1266 = vsel %vm1234, 1, 0
          %v1267 = vsel %vm1235, 1, 0
          %v1268 = vsel %vm1236, 1, 0
          %v1269 = vsel %vm1237, 1, 0
          %v1270 = vsel %vm1238, 1, 0
          %v1271 = vsel %vm1239, 1, 0
          %v1272 = vsel %vm1240, 1, 0
          %v1273 = vsel %vm1241, 1, 0
          %v1274 = vsel %vm1242, 1, 0
          %v1275 = vsel %vm1243, 1, 0
          %v1276 = vsel %vm1244, 1, 0
          %v1277 = vsel %vm1245, 1, 0
          %v1278 = vsel %vm1246, 1, 0
          %v1279 = vsel %vm1247, 1, 0
          %v1280 = vsel %vm1248, 1, 0
          %v1281 = vsel %vm1249, 1, 0
          %v1282 = vsel %vm1250, 1, 0
          %v1283 = vsel %vm1251, 1, 0
          %v1284 = vsel %vm1252, 1, 0
          %v1285 = vsel %vm1253, 1, 0
          %v1286 = vsel %vm1254, 1, 0
          %v1287 = vsel %vm1255, 1, 0
          %v1288 = vsel %vm1256, 1, 0
          %v1289 = vsel %vm1257, 1, 0
          %v1290 = vsel %vm1258, 1, 0
          %v1291 = vcvt.s32.f32 %v1259
          %v1292 = vcvt.s32.f32 %v1260
          %v1293 = vcvt.s32.f32 %v1261
          %v1294 = vcvt.s32.f32 %v1262
          %v1295 = vcvt.s32.f32 %v1263
          %v1296 = vcvt.s32.f32 %v1264
          %v1297 = vcvt.s32.f32 %v1265
          %v1298 = vcvt.s32.f32 %v1266
          %v1299 = vcvt.s32.f32 %v1267
          %v1300 = vcvt.s32.f32 %v1268
          %v1301 = vcvt.s32.f32 %v1269
          %v1302 = vcvt.s32.f32 %v1270
          %v1303 = vcvt.s32.f32 %v1271
          %v1304 = vcvt.s32.f32 %v1272
          %v1305 = vcvt.s32.f32 %v1273
          %v1306 = vcvt.s32.f32 %v1274
          %v1307 = vcvt.s32.f32 %v1275
          %v1308 = vcvt.s32.f32 %v1276
          %v1309 = vcvt.s32.f32 %v1277
          %v1310 = vcvt.s32.f32 %v1278
          %v1311 = vcvt.s32.f32 %v1279
          %v1312 = vcvt.s32.f32 %v1280
          %v1313 = vcvt.s32.f32 %v1281
          %v1314 = vcvt.s32.f32 %v1282
          %v1315 = vcvt.s32.f32 %v1283
          %v1316 = vcvt.s32.f32 %v1284
          %v1317 = vcvt.s32.f32 %v1285
          %v1318 = vcvt.s32.f32 %v1286
          %v1319 = vcvt.s32.f32 %v1287
          %v1320 = vcvt.s32.f32 %v1288
          %v1321 = vcvt.s32.f32 %v1289
          %v1322 = vcvt.s32.f32 %v1290
          %v1323 = vpack.c.bf16 %v1293, %v1291
          %v1324 = vpack.c.bf16 %v1294, %v1292
          %v1325 = vpack.c.bf16 %v1297, %v1295
          %v1326 = vpack.c.bf16 %v1298, %v1296
          %v1327 = vpack.c.bf16 %v1301, %v1299
          %v1328 = vpack.c.bf16 %v1302, %v1300
          %v1329 = vpack.c.bf16 %v1305, %v1303
          %v1330 = vpack.c.bf16 %v1306, %v1304
          %v1331 = vpack.c.bf16 %v1309, %v1307
          %v1332 = vpack.c.bf16 %v1310, %v1308
          %v1333 = vpack.c.bf16 %v1313, %v1311
          %v1334 = vpack.c.bf16 %v1314, %v1312
          %v1335 = vpack.c.bf16 %v1317, %v1315
          %v1336 = vpack.c.bf16 %v1318, %v1316
          %v1337 = vpack.c.bf16 %v1321, %v1319
          %v1338 = vpack.c.bf16 %v1322, %v1320
          %1339 = vmatprep.subr.bf16.mxu0 %v1338
          %1340 = vmatpush1.bf16.msra.mxu0 %v1337
          %1341 = vmatprep.subr.bf16.mxu0 %v1336
          %1342 = vmatpush1.bf16.msra.mxu0 %v1335
          %1343 = vmatprep.subr.bf16.mxu0 %v1334
          %1344 = vmatpush1.bf16.msra.mxu0 %v1333
          %1345 = vmatprep.subr.bf16.mxu0 %v1332
          %1346 = vmatpush1.bf16.msra.mxu0 %v1331
          %1347 = vmatprep.subr.bf16.mxu0 %v1330
          %1348 = vmatpush1.bf16.msra.mxu0 %v1329
          %1349 = vmatprep.subr.bf16.mxu0 %v1328
          %1350 = vmatpush1.bf16.msra.mxu0 %v1327
          %1351 = vmatprep.subr.bf16.mxu0 %v1326
          %1352 = vmatpush1.bf16.msra.mxu0 %v1325
          %1353 = vmatprep.subr.bf16.mxu0 %v1324
          %1354 = vmatpush1.bf16.msra.mxu0 %v1323
          %1355 = vmatprep.subr.bf16.mxu0 0
          %1356 = vmatpush2.bf16.msra.mxu0 0
          %1357 = vmatprep.subr.bf16.mxu0 0
          %1358 = vmatpush2.bf16.msra.mxu0 0
          %1359 = vmatprep.subr.bf16.mxu0 0
          %1360 = vmatpush2.bf16.msra.mxu0 0
          %1361 = vmatprep.subr.bf16.mxu0 0
          %1362 = vmatpush2.bf16.msra.mxu0 0
          %1363 = vmatprep.subr.bf16.mxu0 0
          %1364 = vmatpush2.bf16.msra.mxu0 0
          %1365 = vmatprep.subr.bf16.mxu0 0
          %1366 = vmatpush2.bf16.msra.mxu0 0
          %1367 = vmatprep.subr.bf16.mxu0 0
          %1368 = vmatpush2.bf16.msra.mxu0 0
          %1369 = vmatprep.subr.bf16.mxu0 0
          %1370 = vmatpush2.bf16.msra.mxu0 0
          %1371 = vmatprep.mubr.bf16.mxu0 0
          %1372 = vmatmul.mubr.bf16.gmra.mxu0 %v389
          %v1373 = vpop.f32.mrf.mxu0
          %v1374 = vadd.f32 0.0, %v1373
          %v1375 = vpop.f32.mrf.mxu0
          %v1376 = vadd.f32 0.0, %v1375
          %v1377 = vpop.f32.mrf.mxu0
          %v1378 = vpop.f32.mrf.mxu0
          %1379 = vdwg.mxu0
          %1380 = vmatprep.subr.bf16.mxu0 %v1226
          %1381 = vmatpush1.bf16.msra.mxu0 %v1225
          %1382 = vmatprep.subr.bf16.mxu0 %v1224
          %1383 = vmatpush1.bf16.msra.mxu0 %v1223
          %1384 = vmatprep.subr.bf16.mxu0 %v1222
          %1385 = vmatpush1.bf16.msra.mxu0 %v1221
          %1386 = vmatprep.subr.bf16.mxu0 %v1220
          %1387 = vmatpush1.bf16.msra.mxu0 %v1219
          %1388 = vmatprep.subr.bf16.mxu0 %v1218
          %1389 = vmatpush1.bf16.msra.mxu0 %v1217
          %1390 = vmatprep.subr.bf16.mxu0 %v1216
          %1391 = vmatpush1.bf16.msra.mxu0 %v1215
          %1392 = vmatprep.subr.bf16.mxu0 %v1214
          %1393 = vmatpush1.bf16.msra.mxu0 %v1213
          %1394 = vmatprep.subr.bf16.mxu0 %v1212
          %1395 = vmatpush1.bf16.msra.mxu0 %v1211
          %1396 = vmatprep.subr.bf16.mxu0 0
          %1397 = vmatpush2.bf16.msra.mxu0 0
          %1398 = vmatprep.subr.bf16.mxu0 0
          %1399 = vmatpush2.bf16.msra.mxu0 0
          %1400 = vmatprep.subr.bf16.mxu0 0
          %1401 = vmatpush2.bf16.msra.mxu0 0
          %1402 = vmatprep.subr.bf16.mxu0 0
          %1403 = vmatpush2.bf16.msra.mxu0 0
          %1404 = vmatprep.subr.bf16.mxu0 0
          %1405 = vmatpush2.bf16.msra.mxu0 0
          %1406 = vmatprep.subr.bf16.mxu0 0
          %1407 = vmatpush2.bf16.msra.mxu0 0
          %1408 = vmatprep.subr.bf16.mxu0 0
          %1409 = vmatpush2.bf16.msra.mxu0 0
          %1410 = vmatprep.subr.bf16.mxu0 0
          %1411 = vmatpush2.bf16.msra.mxu0 0
          %1412 = vmatprep.mubr.bf16.mxu0 0
          %1413 = vmatmul.mubr.bf16.gmra.mxu0 %v386
          %v1414 = vpop.f32.mrf.mxu0
          %v1415 = vadd.f32 %v1374, %v1414
          %v1416 = vpop.f32.mrf.mxu0
          %v1417 = vadd.f32 %v1376, %v1416
          %v1418 = vpop.f32.mrf.mxu0
          %v1419 = vpop.f32.mrf.mxu0
          %1420 = vdwg.mxu0
          %v1423 = vrot.slane %v1415, 2
          %v1424 = vrot.slane %v1417, 2
          %v1427 = vadd.f32 %v1415, %v1423
          %v1428 = vadd.f32 %v1417, %v1424
          %v1429 = vrot.slane %v1415, 4
          %v1430 = vrot.slane %v1417, 4
          %v1433 = vadd.f32 %v1427, %v1429
          %v1434 = vadd.f32 %v1428, %v1430
          %v1436 = vlaneseq
          %v1437 = vshrl.u32 %v1436, 7
          %v1438 = vsub.s32 0, %v1437
          %v1439 = vrot.slane %v298, %v1438
          %v1440 = vlaneseq
          %v1441 = vshrl.u32 %v1440, 7
          %v1442 = vsub.s32 2, %v1441
          %v1443 = vrot.slane %v298, %v1442
          %v1446 = vlaneseq
          %v1447 = vshrl.u32 %v1446, 7
          %v1448 = vsub.s32 0, %v1447
          %v1449 = vrot.slane %v1439, %v1448
          %v1450 = vlaneseq
          %v1451 = vshrl.u32 %v1450, 7
          %v1452 = vsub.s32 0, %v1451
          %v1453 = vrot.slane %v1443, %v1452
          %v1454 = vmul.f32 %v1449, %v1433
          %v1455 = vmul.f32 %v1453, %v1434
          %v1456 = vadd.f32 %v1105, %v1454
          %v1457 = vadd.f32 %v1106, %v1455
          %v1458 = vlaneseq
          %v1459 = vshrl.u32 %v1458, 7
          %v1460 = vsub.s32 0, %v1459
          %v1461 = vrot.slane %v272, %v1460
          %v1462 = vlaneseq
          %v1463 = vshrl.u32 %v1462, 7
          %v1464 = vsub.s32 0, %v1463
          %v1465 = vrot.slane %v273, %v1464
          %vm1466 = vcmp.eq.s32.totalorder %v178, %v1461
          %vm1467 = vcmp.eq.s32.totalorder %v178, %v1465
          %vm1468 = vcmp.eq.s32.totalorder %v179, %v1461
          %vm1469 = vcmp.eq.s32.totalorder %v179, %v1465
          %vm1470 = vcmp.eq.s32.totalorder %v180, %v1461
          %vm1471 = vcmp.eq.s32.totalorder %v180, %v1465
          %vm1472 = vcmp.eq.s32.totalorder %v181, %v1461
          %vm1473 = vcmp.eq.s32.totalorder %v181, %v1465
          %vm1474 = vcmp.eq.s32.totalorder %v182, %v1461
          %vm1475 = vcmp.eq.s32.totalorder %v182, %v1465
          %vm1476 = vcmp.eq.s32.totalorder %v183, %v1461
          %vm1477 = vcmp.eq.s32.totalorder %v183, %v1465
          %vm1478 = vcmp.eq.s32.totalorder %v184, %v1461
          %vm1479 = vcmp.eq.s32.totalorder %v184, %v1465
          %vm1480 = vcmp.eq.s32.totalorder %v185, %v1461
          %vm1481 = vcmp.eq.s32.totalorder %v185, %v1465
          %vm1482 = vcmp.eq.s32.totalorder %v186, %v1461
          %vm1483 = vcmp.eq.s32.totalorder %v186, %v1465
          %vm1484 = vcmp.eq.s32.totalorder %v187, %v1461
          %vm1485 = vcmp.eq.s32.totalorder %v187, %v1465
          %vm1486 = vcmp.eq.s32.totalorder %v188, %v1461
          %vm1487 = vcmp.eq.s32.totalorder %v188, %v1465
          %vm1488 = vcmp.eq.s32.totalorder %v189, %v1461
          %vm1489 = vcmp.eq.s32.totalorder %v189, %v1465
          %vm1490 = vcmp.eq.s32.totalorder %v190, %v1461
          %vm1491 = vcmp.eq.s32.totalorder %v190, %v1465
          %vm1492 = vcmp.eq.s32.totalorder %v191, %v1461
          %vm1493 = vcmp.eq.s32.totalorder %v191, %v1465
          %vm1494 = vcmp.eq.s32.totalorder %v192, %v1461
          %vm1495 = vcmp.eq.s32.totalorder %v192, %v1465
          %vm1496 = vcmp.eq.s32.totalorder %v193, %v1461
          %vm1497 = vcmp.eq.s32.totalorder %v193, %v1465
          %v1498 = vsel %vm1466, 1, 0
          %v1499 = vsel %vm1467, 1, 0
          %v1500 = vsel %vm1468, 1, 0
          %v1501 = vsel %vm1469, 1, 0
          %v1502 = vsel %vm1470, 1, 0
          %v1503 = vsel %vm1471, 1, 0
          %v1504 = vsel %vm1472, 1, 0
          %v1505 = vsel %vm1473, 1, 0
          %v1506 = vsel %vm1474, 1, 0
          %v1507 = vsel %vm1475, 1, 0
          %v1508 = vsel %vm1476, 1, 0
          %v1509 = vsel %vm1477, 1, 0
          %v1510 = vsel %vm1478, 1, 0
          %v1511 = vsel %vm1479, 1, 0
          %v1512 = vsel %vm1480, 1, 0
          %v1513 = vsel %vm1481, 1, 0
          %v1514 = vsel %vm1482, 1, 0
          %v1515 = vsel %vm1483, 1, 0
          %v1516 = vsel %vm1484, 1, 0
          %v1517 = vsel %vm1485, 1, 0
          %v1518 = vsel %vm1486, 1, 0
          %v1519 = vsel %vm1487, 1, 0
          %v1520 = vsel %vm1488, 1, 0
          %v1521 = vsel %vm1489, 1, 0
          %v1522 = vsel %vm1490, 1, 0
          %v1523 = vsel %vm1491, 1, 0
          %v1524 = vsel %vm1492, 1, 0
          %v1525 = vsel %vm1493, 1, 0
          %v1526 = vsel %vm1494, 1, 0
          %v1527 = vsel %vm1495, 1, 0
          %v1528 = vsel %vm1496, 1, 0
          %v1529 = vsel %vm1497, 1, 0
          %v1530 = vcvt.s32.f32 %v1498
          %v1531 = vcvt.s32.f32 %v1499
          %v1532 = vcvt.s32.f32 %v1500
          %v1533 = vcvt.s32.f32 %v1501
          %v1534 = vcvt.s32.f32 %v1502
          %v1535 = vcvt.s32.f32 %v1503
          %v1536 = vcvt.s32.f32 %v1504
          %v1537 = vcvt.s32.f32 %v1505
          %v1538 = vcvt.s32.f32 %v1506
          %v1539 = vcvt.s32.f32 %v1507
          %v1540 = vcvt.s32.f32 %v1508
          %v1541 = vcvt.s32.f32 %v1509
          %v1542 = vcvt.s32.f32 %v1510
          %v1543 = vcvt.s32.f32 %v1511
          %v1544 = vcvt.s32.f32 %v1512
          %v1545 = vcvt.s32.f32 %v1513
          %v1546 = vcvt.s32.f32 %v1514
          %v1547 = vcvt.s32.f32 %v1515
          %v1548 = vcvt.s32.f32 %v1516
          %v1549 = vcvt.s32.f32 %v1517
          %v1550 = vcvt.s32.f32 %v1518
          %v1551 = vcvt.s32.f32 %v1519
          %v1552 = vcvt.s32.f32 %v1520
          %v1553 = vcvt.s32.f32 %v1521
          %v1554 = vcvt.s32.f32 %v1522
          %v1555 = vcvt.s32.f32 %v1523
          %v1556 = vcvt.s32.f32 %v1524
          %v1557 = vcvt.s32.f32 %v1525
          %v1558 = vcvt.s32.f32 %v1526
          %v1559 = vcvt.s32.f32 %v1527
          %v1560 = vcvt.s32.f32 %v1528
          %v1561 = vcvt.s32.f32 %v1529
          %v1562 = vpack.c.bf16 %v1532, %v1530
          %v1563 = vpack.c.bf16 %v1533, %v1531
          %v1564 = vpack.c.bf16 %v1536, %v1534
          %v1565 = vpack.c.bf16 %v1537, %v1535
          %v1566 = vpack.c.bf16 %v1540, %v1538
          %v1567 = vpack.c.bf16 %v1541, %v1539
          %v1568 = vpack.c.bf16 %v1544, %v1542
          %v1569 = vpack.c.bf16 %v1545, %v1543
          %v1570 = vpack.c.bf16 %v1548, %v1546
          %v1571 = vpack.c.bf16 %v1549, %v1547
          %v1572 = vpack.c.bf16 %v1552, %v1550
          %v1573 = vpack.c.bf16 %v1553, %v1551
          %v1574 = vpack.c.bf16 %v1556, %v1554
          %v1575 = vpack.c.bf16 %v1557, %v1555
          %v1576 = vpack.c.bf16 %v1560, %v1558
          %v1577 = vpack.c.bf16 %v1561, %v1559
          %vm1578 = vcmp.eq.s32.totalorder %v511, %v1461
          %vm1579 = vcmp.eq.s32.totalorder %v511, %v1465
          %vm1580 = vcmp.eq.s32.totalorder %v512, %v1461
          %vm1581 = vcmp.eq.s32.totalorder %v512, %v1465
          %vm1582 = vcmp.eq.s32.totalorder %v513, %v1461
          %vm1583 = vcmp.eq.s32.totalorder %v513, %v1465
          %vm1584 = vcmp.eq.s32.totalorder %v514, %v1461
          %vm1585 = vcmp.eq.s32.totalorder %v514, %v1465
          %vm1586 = vcmp.eq.s32.totalorder %v515, %v1461
          %vm1587 = vcmp.eq.s32.totalorder %v515, %v1465
          %vm1588 = vcmp.eq.s32.totalorder %v516, %v1461
          %vm1589 = vcmp.eq.s32.totalorder %v516, %v1465
          %vm1590 = vcmp.eq.s32.totalorder %v517, %v1461
          %vm1591 = vcmp.eq.s32.totalorder %v517, %v1465
          %vm1592 = vcmp.eq.s32.totalorder %v518, %v1461
          %vm1593 = vcmp.eq.s32.totalorder %v518, %v1465
          %vm1594 = vcmp.eq.s32.totalorder %v519, %v1461
          %vm1595 = vcmp.eq.s32.totalorder %v519, %v1465
          %vm1596 = vcmp.eq.s32.totalorder %v520, %v1461
          %vm1597 = vcmp.eq.s32.totalorder %v520, %v1465
          %vm1598 = vcmp.eq.s32.totalorder %v521, %v1461
          %vm1599 = vcmp.eq.s32.totalorder %v521, %v1465
          %vm1600 = vcmp.eq.s32.totalorder %v522, %v1461
          %vm1601 = vcmp.eq.s32.totalorder %v522, %v1465
          %vm1602 = vcmp.eq.s32.totalorder %v523, %v1461
          %vm1603 = vcmp.eq.s32.totalorder %v523, %v1465
          %vm1604 = vcmp.eq.s32.totalorder %v524, %v1461
          %vm1605 = vcmp.eq.s32.totalorder %v524, %v1465
          %vm1606 = vcmp.eq.s32.totalorder %v525, %v1461
          %vm1607 = vcmp.eq.s32.totalorder %v525, %v1465
          %vm1608 = vcmp.eq.s32.totalorder %v526, %v1461
          %vm1609 = vcmp.eq.s32.totalorder %v526, %v1465
          %v1610 = vsel %vm1578, 1, 0
          %v1611 = vsel %vm1579, 1, 0
          %v1612 = vsel %vm1580, 1, 0
          %v1613 = vsel %vm1581, 1, 0
          %v1614 = vsel %vm1582, 1, 0
          %v1615 = vsel %vm1583, 1, 0
          %v1616 = vsel %vm1584, 1, 0
          %v1617 = vsel %vm1585, 1, 0
          %v1618 = vsel %vm1586, 1, 0
          %v1619 = vsel %vm1587, 1, 0
          %v1620 = vsel %vm1588, 1, 0
          %v1621 = vsel %vm1589, 1, 0
          %v1622 = vsel %vm1590, 1, 0
          %v1623 = vsel %vm1591, 1, 0
          %v1624 = vsel %vm1592, 1, 0
          %v1625 = vsel %vm1593, 1, 0
          %v1626 = vsel %vm1594, 1, 0
          %v1627 = vsel %vm1595, 1, 0
          %v1628 = vsel %vm1596, 1, 0
          %v1629 = vsel %vm1597, 1, 0
          %v1630 = vsel %vm1598, 1, 0
          %v1631 = vsel %vm1599, 1, 0
          %v1632 = vsel %vm1600, 1, 0
          %v1633 = vsel %vm1601, 1, 0
          %v1634 = vsel %vm1602, 1, 0
          %v1635 = vsel %vm1603, 1, 0
          %v1636 = vsel %vm1604, 1, 0
          %v1637 = vsel %vm1605, 1, 0
          %v1638 = vsel %vm1606, 1, 0
          %v1639 = vsel %vm1607, 1, 0
          %v1640 = vsel %vm1608, 1, 0
          %v1641 = vsel %vm1609, 1, 0
          %v1642 = vcvt.s32.f32 %v1610
          %v1643 = vcvt.s32.f32 %v1611
          %v1644 = vcvt.s32.f32 %v1612
          %v1645 = vcvt.s32.f32 %v1613
          %v1646 = vcvt.s32.f32 %v1614
          %v1647 = vcvt.s32.f32 %v1615
          %v1648 = vcvt.s32.f32 %v1616
          %v1649 = vcvt.s32.f32 %v1617
          %v1650 = vcvt.s32.f32 %v1618
          %v1651 = vcvt.s32.f32 %v1619
          %v1652 = vcvt.s32.f32 %v1620
          %v1653 = vcvt.s32.f32 %v1621
          %v1654 = vcvt.s32.f32 %v1622
          %v1655 = vcvt.s32.f32 %v1623
          %v1656 = vcvt.s32.f32 %v1624
          %v1657 = vcvt.s32.f32 %v1625
          %v1658 = vcvt.s32.f32 %v1626
          %v1659 = vcvt.s32.f32 %v1627
          %v1660 = vcvt.s32.f32 %v1628
          %v1661 = vcvt.s32.f32 %v1629
          %v1662 = vcvt.s32.f32 %v1630
          %v1663 = vcvt.s32.f32 %v1631
          %v1664 = vcvt.s32.f32 %v1632
          %v1665 = vcvt.s32.f32 %v1633
          %v1666 = vcvt.s32.f32 %v1634
          %v1667 = vcvt.s32.f32 %v1635
          %v1668 = vcvt.s32.f32 %v1636
          %v1669 = vcvt.s32.f32 %v1637
          %v1670 = vcvt.s32.f32 %v1638
          %v1671 = vcvt.s32.f32 %v1639
          %v1672 = vcvt.s32.f32 %v1640
          %v1673 = vcvt.s32.f32 %v1641
          %v1674 = vpack.c.bf16 %v1644, %v1642
          %v1675 = vpack.c.bf16 %v1645, %v1643
          %v1676 = vpack.c.bf16 %v1648, %v1646
          %v1677 = vpack.c.bf16 %v1649, %v1647
          %v1678 = vpack.c.bf16 %v1652, %v1650
          %v1679 = vpack.c.bf16 %v1653, %v1651
          %v1680 = vpack.c.bf16 %v1656, %v1654
          %v1681 = vpack.c.bf16 %v1657, %v1655
          %v1682 = vpack.c.bf16 %v1660, %v1658
          %v1683 = vpack.c.bf16 %v1661, %v1659
          %v1684 = vpack.c.bf16 %v1664, %v1662
          %v1685 = vpack.c.bf16 %v1665, %v1663
          %v1686 = vpack.c.bf16 %v1668, %v1666
          %v1687 = vpack.c.bf16 %v1669, %v1667
          %v1688 = vpack.c.bf16 %v1672, %v1670
          %v1689 = vpack.c.bf16 %v1673, %v1671
          %1690 = vmatprep.subr.bf16.mxu0 %v1689
          %1691 = vmatpush1.bf16.msra.mxu0 %v1688
          %1692 = vmatprep.subr.bf16.mxu0 %v1687
          %1693 = vmatpush1.bf16.msra.mxu0 %v1686
          %1694 = vmatprep.subr.bf16.mxu0 %v1685
          %1695 = vmatpush1.bf16.msra.mxu0 %v1684
          %1696 = vmatprep.subr.bf16.mxu0 %v1683
          %1697 = vmatpush1.bf16.msra.mxu0 %v1682
          %1698 = vmatprep.subr.bf16.mxu0 %v1681
          %1699 = vmatpush1.bf16.msra.mxu0 %v1680
          %1700 = vmatprep.subr.bf16.mxu0 %v1679
          %1701 = vmatpush1.bf16.msra.mxu0 %v1678
          %1702 = vmatprep.subr.bf16.mxu0 %v1677
          %1703 = vmatpush1.bf16.msra.mxu0 %v1676
          %1704 = vmatprep.subr.bf16.mxu0 %v1675
          %1705 = vmatpush1.bf16.msra.mxu0 %v1674
          %1706 = vmatprep.subr.bf16.mxu0 0
          %1707 = vmatpush2.bf16.msra.mxu0 0
          %1708 = vmatprep.subr.bf16.mxu0 0
          %1709 = vmatpush2.bf16.msra.mxu0 0
          %1710 = vmatprep.subr.bf16.mxu0 0
          %1711 = vmatpush2.bf16.msra.mxu0 0
          %1712 = vmatprep.subr.bf16.mxu0 0
          %1713 = vmatpush2.bf16.msra.mxu0 0
          %1714 = vmatprep.subr.bf16.mxu0 0
          %1715 = vmatpush2.bf16.msra.mxu0 0
          %1716 = vmatprep.subr.bf16.mxu0 0
          %1717 = vmatpush2.bf16.msra.mxu0 0
          %1718 = vmatprep.subr.bf16.mxu0 0
          %1719 = vmatpush2.bf16.msra.mxu0 0
          %1720 = vmatprep.subr.bf16.mxu0 0
          %1721 = vmatpush2.bf16.msra.mxu0 0
          %1722 = vmatprep.mubr.bf16.mxu0 0
          %1723 = vmatmul.mubr.bf16.gmra.mxu0 %v389
          %v1724 = vpop.f32.mrf.mxu0
          %v1725 = vadd.f32 0.0, %v1724
          %v1726 = vpop.f32.mrf.mxu0
          %v1727 = vadd.f32 0.0, %v1726
          %v1728 = vpop.f32.mrf.mxu0
          %v1729 = vpop.f32.mrf.mxu0
          %1730 = vdwg.mxu0
          %1731 = vmatprep.subr.bf16.mxu0 %v1577
          %1732 = vmatpush1.bf16.msra.mxu0 %v1576
          %1733 = vmatprep.subr.bf16.mxu0 %v1575
          %1734 = vmatpush1.bf16.msra.mxu0 %v1574
          %1735 = vmatprep.subr.bf16.mxu0 %v1573
          %1736 = vmatpush1.bf16.msra.mxu0 %v1572
          %1737 = vmatprep.subr.bf16.mxu0 %v1571
          %1738 = vmatpush1.bf16.msra.mxu0 %v1570
          %1739 = vmatprep.subr.bf16.mxu0 %v1569
          %1740 = vmatpush1.bf16.msra.mxu0 %v1568
          %1741 = vmatprep.subr.bf16.mxu0 %v1567
          %1742 = vmatpush1.bf16.msra.mxu0 %v1566
          %1743 = vmatprep.subr.bf16.mxu0 %v1565
          %1744 = vmatpush1.bf16.msra.mxu0 %v1564
          %1745 = vmatprep.subr.bf16.mxu0 %v1563
          %1746 = vmatpush1.bf16.msra.mxu0 %v1562
          %1747 = vmatprep.subr.bf16.mxu0 0
          %1748 = vmatpush2.bf16.msra.mxu0 0
          %1749 = vmatprep.subr.bf16.mxu0 0
          %1750 = vmatpush2.bf16.msra.mxu0 0
          %1751 = vmatprep.subr.bf16.mxu0 0
          %1752 = vmatpush2.bf16.msra.mxu0 0
          %1753 = vmatprep.subr.bf16.mxu0 0
          %1754 = vmatpush2.bf16.msra.mxu0 0
          %1755 = vmatprep.subr.bf16.mxu0 0
          %1756 = vmatpush2.bf16.msra.mxu0 0
          %1757 = vmatprep.subr.bf16.mxu0 0
          %1758 = vmatpush2.bf16.msra.mxu0 0
          %1759 = vmatprep.subr.bf16.mxu0 0
          %1760 = vmatpush2.bf16.msra.mxu0 0
          %1761 = vmatprep.subr.bf16.mxu0 0
          %1762 = vmatpush2.bf16.msra.mxu0 0
          %1763 = vmatprep.mubr.bf16.mxu0 0
          %1764 = vmatmul.mubr.bf16.gmra.mxu0 %v386
          %v1765 = vpop.f32.mrf.mxu0
          %v1766 = vadd.f32 %v1725, %v1765
          %v1767 = vpop.f32.mrf.mxu0
          %v1768 = vadd.f32 %v1727, %v1767
          %v1769 = vpop.f32.mrf.mxu0
          %v1770 = vpop.f32.mrf.mxu0
          %1771 = vdwg.mxu0
          %v1774 = vrot.slane %v1766, 2
          %v1775 = vrot.slane %v1768, 2
          %v1778 = vadd.f32 %v1766, %v1774
          %v1779 = vadd.f32 %v1768, %v1775
          %v1780 = vrot.slane %v1766, 4
          %v1781 = vrot.slane %v1768, 4
          %v1784 = vadd.f32 %v1778, %v1780
          %v1785 = vadd.f32 %v1779, %v1781
          %v1787 = vlaneseq
          %v1788 = vshrl.u32 %v1787, 7
          %v1789 = vsub.s32 0, %v1788
          %v1790 = vrot.slane %v301, %v1789
          %v1791 = vlaneseq
          %v1792 = vshrl.u32 %v1791, 7
          %v1793 = vsub.s32 2, %v1792
          %v1794 = vrot.slane %v301, %v1793
          %v1797 = vlaneseq
          %v1798 = vshrl.u32 %v1797, 7
          %v1799 = vsub.s32 0, %v1798
          %v1800 = vrot.slane %v1790, %v1799
          %v1801 = vlaneseq
          %v1802 = vshrl.u32 %v1801, 7
          %v1803 = vsub.s32 0, %v1802
          %v1804 = vrot.slane %v1794, %v1803
          %v1805 = vmul.f32 %v1800, %v1784
          %v1806 = vmul.f32 %v1804, %v1785
          %v1807 = vadd.f32 %v1456, %v1805
          %v1808 = vadd.f32 %v1457, %v1806
          %v1811 = vcombine.low %v1807, %v1808
          %v1813 = vunpack.c.l.s4 1983009808
          %v1814 = vunpack.c.0.s8 %v1813
          %v1815 = vlaneseq
          %v1816 = vshrl.u32 %v1815, 7
          %v1817 = vsub.s32 %v1814, %v1816
          %v1818 = vrot.slane %v1811, %v1817
          %v1820 = vadd.f32 %v200, %v1818
        $region41: #{tpu_custom_call.1} parent=27 // loop_footer
          %s199 = sadd.s32 1, %s195
        $region42: #{tpu_custom_call.1} parent=27 // loop_footer_branch
          %194 = sbr.rel target = $region38
        $region43: #{tpu_custom_call.1} parent=27 // loop_exit
          _
        %1821 = vst [vmem:[%s172] sm:$0xf] %v200
        %s1822 = sand.u32 %s75, 1
        %s1823 = scalar_lea.sflag [#allocation4], %s1822
        %s1824 = sand.u32 %s75, 1
        %s1825 = smul.addr %s1824, 4
        %s1826 = scalar_lea.vmem [#allocation7], %s1825
        // Predicated region
        $region44: #{tpu_custom_call.1} parent=27 // pred_check
          %p1827 = pneg %p85
        $region45: #{tpu_custom_call.1} parent=27 // pred_check_branch
          %1829 = sbr.rel (%p1827) target = $region47
        $region46: #{tpu_custom_call.1} parent=27 // pred_region
          %s1831 = ssub.s32 64, 64
          %1832 = vsyncadd %s1823, %s1831
          %s1833 = smul.addr %s20, 2
          %s1834 = smul.addr %s1833, 32
          %s1835 = scalar_lea.hbm %s2, %s1834
          %s1837 = sshll.u32 %s1826, 4
          %s1838 = int_to_ptr.vmem [resolvable:$true] %s1837
          %1840 = dma.vmem_to_hbm [thread:$0]  %s1838, 64, %s1835, %s1823
        $region47: #{tpu_custom_call.1} parent=27 // pred_fallthru
          _
      $region28: #{tpu_custom_call.1} parent=5 // pred_fallthru
        _
      %p1841 = scmp.le.s32.totalorder 2, %s15
      // Predicated region
      $region48: #{tpu_custom_call.1} parent=5 // pred_check
        %p1842 = pneg %p1841
      $region49: #{tpu_custom_call.1} parent=5 // pred_check_branch
        %1844 = sbr.rel (%p1842) target = $region51
      $region50: #{tpu_custom_call.1} parent=5 // pred_region
        %s1845 = ssub.s32 %s15, 2
        // Predicated region
        $region52: #{tpu_custom_call.1} parent=50 // pred_check
          %p1846 = pneg %p91
        $region53: #{tpu_custom_call.1} parent=50 // pred_check_branch
          %1848 = sbr.rel (%p1846) target = $region55
        $region54: #{tpu_custom_call.1} parent=50 // pred_region
          %s1849 = sand.u32 %s76, 1
          %s1850 = scalar_lea.sflag [#allocation4], %s1849
          %s1851 = sand.u32 %s76, 1
          %s1852 = smul.addr %s1851, 4
          %s1853 = scalar_lea.vmem [#allocation7], %s1852
          %1854 = dma.done %s1850, 64
        $region55: #{tpu_custom_call.1} parent=50 // pred_fallthru
          _
      $region51: #{tpu_custom_call.1} parent=5 // pred_fallthru
        _
    $region6: #{tpu_custom_call.1} parent=1 // loop_footer
      %s19 = sadd.s32 1, %s15
    $region7: #{tpu_custom_call.1} parent=1 // loop_footer_branch
      %14 = sbr.rel target = $region3
    $region8: #{tpu_custom_call.1} parent=1 // loop_exit
      _
    %1855 = vsyncpa [#allocation3], 1
    %s1856 = scalar_lea.sflag [#allocation3], 1
    %1857 = vsyncpa %s1856, 1
    %1858 = vsyncpa [#allocation6], 1
    %1859 = vsyncpa [#allocation4], 1
    %s1860 = scalar_lea.sflag [#allocation4], 1
    %1861 = vsyncpa %s1860, 1

</llo_original>
